<compile_context>
chip_gen: v7x
topology: tpu7x:2x2x1
jax: 0.10.0
libtpu: 0.0.40
codegen_flags: <defaults>
</compile_context>

<pallas_src>
import functools

import jax
import jax.numpy as jnp
from jax.experimental import pallas as pl
from jax.experimental.pallas import tpu as pltpu


_ACTIVATIONS = {
    "relu": lambda v: jnp.maximum(v, 0.0),
    "relu6": lambda v: jnp.clip(v, 0.0, 6.0),
    "leaky_relu": lambda v: jnp.where(v >= 0, v, 0.03 * v),
    "elu": lambda v: jnp.where(v > 0, v, jnp.expm1(v)),
    "tanh": jnp.tanh,
    "sigmoid": jax.nn.sigmoid,
    "softplus": jax.nn.softplus,
}
# TODO(synk): remaining activation choices (hardshrink, prelu, rrelu, ...) and the
# 'ln'/'in' normalizers of the torch module are not wired up; only 'bn' (training-mode
# batch statistics) is implemented.


def _gnn_atomic_main_kernel(x_ref, wt_ref, cw_ref, b_ref, y_ref, *, c_half, act_fn):
    """Fused gmul + conv1/conv2 (1x1) + bias + activation + channel concat.

    x_ref : (1, F, M)      node features (natural layout), M = N = contraction dim
    wt_ref: (1, J, M, Nt)  graph operators, Wt[b, j, m, n] = W[b, m, n, j]
    cw_ref: (C, J*F)       conv1/conv2 weights stacked along output channels
    b_ref : (C, 1)         conv1/conv2 biases stacked
    y_ref : (1, C, Nt)     pre-batchnorm output (channels-first, N in lanes)
    """
    J = wt_ref.shape[1]
    xb = x_ref[0]                                                 # (F, M)
    # gmul: gm[j*F+f, n] = sum_m x[f, m] * W[m, n, j].  J is small & static -> unrolled;
    # each matmul has the full contraction dim K = M = N; results stacked into one slab.
    gm = jnp.concatenate(
        [jnp.dot(xb, wt_ref[0, j], preferred_element_type=jnp.float32)
         for j in range(J)],
        axis=0)                                                   # (J*F, Nt) f32
    # Both 1x1 convs hoisted out of the j-loop: a single matmul over K = J*F.
    y = jnp.dot(cw_ref[...], gm, preferred_element_type=jnp.float32)   # (C, Nt)
    y = y + b_ref[...]                                            # bias, lane broadcast
    y = jnp.concatenate([act_fn(y[:c_half]), y[c_half:]], axis=0)  # act on conv1 half only
    y_ref[0] = y


def _bn_apply_kernel(y_ref, scale_ref, shift_ref, o_ref):
    # Per-channel normalize + affine:  o = y * scale + shift   (N in lanes).
    o_ref[0] = y_ref[0] * scale_ref[...] + shift_ref[...]


def _pick_n_tile(n, max_tile=512):
    """Largest multiple of 128 dividing n (capped at max_tile); else the full dim."""
    if n % 128 != 0:
        return n
    t = 128
    while t * 2 <= max_tile and n % (t * 2) == 0:
        t *= 2
    return t


def gnn_atomic_forward(W, x, conv1_w, conv1_b, conv2_w, conv2_b, bn_gamma, bn_beta,
                       *, activation="relu", bn_eps=1e-5,
                       stream_dtype=jnp.bfloat16, max_n_tile=512):
    """Pallas forward of gnn_atomic.

    W: (B, N, N, J), x: (B, F, N, 1), conv{1,2}_w: (C/2, J*F, 1, 1), conv{1,2}_b: (C/2,),
    bn_gamma/bn_beta: (C,).  Returns (W, y) with y: (B, C, N, 1), like the torch module.
    """
    B, N, _, J = W.shape
    F = x.shape[1]
    c_half = conv1_b.shape[0]
    C = 2 * c_half
    act_fn = _ACTIVATIONS[activation]

    n_tile = _pick_n_tile(N, max_n_tile)
    n_grid = N // n_tile

    # ---- layout glue (plain JAX; the W transpose/cast may be fused into the
    #      pallas_call operand via allow_input_fusion) ----
    x_s = x[..., 0].astype(stream_dtype)                          # (B, F, N) natural layout
    Wt = jnp.transpose(W, (0, 3, 1, 2)).astype(stream_dtype)      # (B, J, M, N)
    cw = jnp.concatenate([conv1_w[..., 0, 0], conv2_w[..., 0, 0]],
                         axis=0).astype(jnp.float32)              # (C, J*F)
    cb = jnp.concatenate([conv1_b, conv2_b]).astype(jnp.float32).reshape(C, 1)

    kernel = functools.partial(_gnn_atomic_main_kernel, c_half=c_half, act_fn=act_fn)
    y = pl.pallas_call(
        kernel,
        out_shape=jax.ShapeDtypeStruct((B, C, N), jnp.float32),
        grid=(B, n_grid),
        in_specs=[
            pl.BlockSpec((1, F, N), lambda b, n: (b, 0, 0)),
            pl.BlockSpec((1, J, N, n_tile), lambda b, n: (b, 0, 0, n)),
            pl.BlockSpec((C, J * F), lambda b, n: (0, 0)),
            pl.BlockSpec((C, 1), lambda b, n: (0, 0)),
        ],
        out_specs=pl.BlockSpec((1, C, n_tile), lambda b, n: (b, 0, n)),
        compiler_params=pltpu.CompilerParams(
            dimension_semantics=("parallel", "parallel"),
            vmem_limit_bytes=64 * 1024 * 1024,
            allow_input_fusion=[True, True, False, False],
        ),
    )(x_s, Wt, cw, cb)

    # ---- BatchNorm2d (training-mode batch statistics). The (C,)-sized reduction is
    #      plain JAX; the elementwise normalize+affine is a lane-dense Pallas kernel. ----
    mean = jnp.mean(y, axis=(0, 2))
    var = jnp.var(y, axis=(0, 2))                                 # biased, as in torch BN
    scale = (bn_gamma.astype(jnp.float32) * jax.lax.rsqrt(var + bn_eps)).reshape(C, 1)
    shift = bn_beta.astype(jnp.float32).reshape(C, 1) - mean.reshape(C, 1) * scale

    out = pl.pallas_call(
        _bn_apply_kernel,
        out_shape=jax.ShapeDtypeStruct((B, C, N), jnp.float32),
        grid=(B, n_grid),
        in_specs=[
            pl.BlockSpec((1, C, n_tile), lambda b, n: (b, 0, n)),
            pl.BlockSpec((C, 1), lambda b, n: (0, 0)),
            pl.BlockSpec((C, 1), lambda b, n: (0, 0)),
        ],
        out_specs=pl.BlockSpec((1, C, n_tile), lambda b, n: (b, 0, n)),
        compiler_params=pltpu.CompilerParams(
            dimension_semantics=("parallel", "parallel")),
    )(y, scale, shift)

    return W, out[..., None]                                      # (B, C, N, 1) NCHW


def reference(W, x, conv1_w, conv1_b, conv2_w, conv2_b, bn_gamma, bn_beta,
              *, activation="relu", bn_eps=1e-5):
    """Pure-JAX (f32, HIGHEST precision) transcription of the PyTorch gnn_atomic forward."""
    B, N, _, J = W.shape
    F = x.shape[1]
    act_fn = _ACTIVATIONS[activation]
    hp = jax.lax.Precision.HIGHEST
    gm = jnp.einsum('bfm,bmnj->bjfn', x[..., 0], W, precision=hp).reshape(B, J * F, N)
    y1 = jnp.einsum('ck,bkn->bcn', conv1_w[..., 0, 0], gm, precision=hp) + conv1_b[None, :, None]
    y2 = jnp.einsum('ck,bkn->bcn', conv2_w[..., 0, 0], gm, precision=hp) + conv2_b[None, :, None]
    y = jnp.concatenate([act_fn(y1), y2], axis=1)
    mean = jnp.mean(y, axis=(0, 2), keepdims=True)
    var = jnp.var(y, axis=(0, 2), keepdims=True)
    y = (y - mean) / jnp.sqrt(var + bn_eps)
    y = y * bn_gamma[None, :, None] + bn_beta[None, :, None]
    return y[..., None]


if __name__ == "__main__":
    # Small shapes that still exercise the N-tiling: B=2 graphs, N=256 nodes, F=8 input
    # features, J=2 graph operators, feature_maps=[8, 16] -> C/2=8, C=16 output channels.
    B, N, F, J = 2, 256, 8, 2
    c_half = 8
    C = 2 * c_half

    key = jax.random.PRNGKey(0)
    kW, kx, k1w, k1b, k2w, k2b, kg, kb = jax.random.split(key, 8)
    W = jax.random.normal(kW, (B, N, N, J), jnp.float32)
    x = jax.random.normal(kx, (B, F, N, 1), jnp.float32)
    conv1_w = 0.1 * jax.random.normal(k1w, (c_half, F * J, 1, 1), jnp.float32)
    conv1_b = 0.1 * jax.random.normal(k1b, (c_half,), jnp.float32)
    conv2_w = 0.1 * jax.random.normal(k2w, (c_half, F * J, 1, 1), jnp.float32)
    conv2_b = 0.1 * jax.random.normal(k2b, (c_half,), jnp.float32)
    bn_gamma = 1.0 + 0.1 * jax.random.normal(kg, (C,), jnp.float32)
    bn_beta = 0.1 * jax.random.normal(kb, (C,), jnp.float32)

    args = (W, x, conv1_w, conv1_b, conv2_w, conv2_b, bn_gamma, bn_beta)

    # bf16-streaming path (the perf-recommended default); f32 MXU accumulation keeps the
    # error small, so a loose tolerance against the exact f32 reference suffices.
    fwd = jax.jit(functools.partial(gnn_atomic_forward,
                                    stream_dtype=jnp.bfloat16, max_n_tile=128))
    W_out, out = fwd(*args)
    out = jax.block_until_ready(out)

    ref = reference(*args)
    assert out.shape == (B, C, N, 1), out.shape
    max_err = float(jnp.max(jnp.abs(out - ref)))
    assert jnp.allclose(out, ref, atol=5e-2, rtol=5e-2), max_err
    print("KERNEL_OK")
</pallas_src>

<mosaic_0001>
module attributes {stable_mosaic.version = 11 : i64} {
  func.func @_gnn_atomic_main_kernel(%arg0: i32, %arg1: i32, %arg2: memref<1x8x256xbf16, #tpu.memory_space<vmem>>, %arg3: memref<1x2x256x128xbf16, #tpu.memory_space<vmem>>, %arg4: memref<16x16xf32, #tpu.memory_space<vmem>>, %arg5: memref<16x1xf32, #tpu.memory_space<vmem>>, %arg6: memref<1x16x128xf32, #tpu.memory_space<vmem>>) attributes {dimension_semantics = [#tpu.dimension_semantics<parallel>, #tpu.dimension_semantics<parallel>], iteration_bounds = array<i64: 2, 2>, scalar_prefetch = 0 : i64, scratch_operands = 0 : i64, tpu.core_type = #tpu.core_type<tc>, window_params = [{transform_indices = @transform_0, window_bounds = array<i64: 1, 8, 256>}, {transform_indices = @transform_1, window_bounds = array<i64: 1, 2, 256, 128>}, {pipeline_mode = #tpu.pipeline_mode<synchronous>, transform_indices = @transform_2, window_bounds = array<i64: 16, 16>}, {pipeline_mode = #tpu.pipeline_mode<synchronous>, transform_indices = @transform_3, window_bounds = array<i64: 16, 1>}, {transform_indices = @transform_4, window_bounds = array<i64: 1, 16, 128>}]} {
    %c0 = arith.constant 0 : index
    %c0_0 = arith.constant 0 : index
    %c0_1 = arith.constant 0 : index
    %0 = vector.load %arg2[%c0, %c0_0, %c0_1] : memref<1x8x256xbf16, #tpu.memory_space<vmem>>, vector<1x8x256xbf16>
    %1 = vector.shape_cast %0 : vector<1x8x256xbf16> to vector<8x256xbf16>
    %c0_2 = arith.constant 0 : index
    %c0_3 = arith.constant 0 : index
    %c0_4 = arith.constant 0 : index
    %c0_5 = arith.constant 0 : index
    %2 = vector.load %arg3[%c0_2, %c0_3, %c0_4, %c0_5] : memref<1x2x256x128xbf16, #tpu.memory_space<vmem>>, vector<1x1x256x128xbf16>
    %3 = vector.shape_cast %2 : vector<1x1x256x128xbf16> to vector<256x128xbf16>
    %cst = arith.constant dense<0.000000e+00> : vector<8x128xf32>
    %4 = tpu.matmul %1, %3, %cst {dimension_numbers = #tpu.dot_dimension_numbers<[1], [0], [0], [1], [0, 0, 1, 1], [], []>} : vector<8x256xbf16>, vector<256x128xbf16>, vector<8x128xf32> -> vector<8x128xf32>
    %c0_6 = arith.constant 0 : index
    %c1 = arith.constant 1 : index
    %c0_7 = arith.constant 0 : index
    %c0_8 = arith.constant 0 : index
    %5 = vector.load %arg3[%c0_6, %c1, %c0_7, %c0_8] : memref<1x2x256x128xbf16, #tpu.memory_space<vmem>>, vector<1x1x256x128xbf16>
    %6 = vector.shape_cast %5 : vector<1x1x256x128xbf16> to vector<256x128xbf16>
    %cst_9 = arith.constant dense<0.000000e+00> : vector<8x128xf32>
    %7 = tpu.matmul %1, %6, %cst_9 {dimension_numbers = #tpu.dot_dimension_numbers<[1], [0], [0], [1], [0, 0, 1, 1], [], []>} : vector<8x256xbf16>, vector<256x128xbf16>, vector<8x128xf32> -> vector<8x128xf32>
    %8 = tpu.concatenate %4, %7 in 0 : vector<8x128xf32>, vector<8x128xf32> -> vector<16x128xf32>
    %c0_10 = arith.constant 0 : index
    %c0_11 = arith.constant 0 : index
    %9 = vector.load %arg4[%c0_10, %c0_11] : memref<16x16xf32, #tpu.memory_space<vmem>>, vector<16x16xf32>
    %cst_12 = arith.constant dense<0.000000e+00> : vector<16x128xf32>
    %10 = tpu.matmul %9, %8, %cst_12 {dimension_numbers = #tpu.dot_dimension_numbers<[1], [0], [0], [1], [0, 0, 1, 1], [], []>} : vector<16x16xf32>, vector<16x128xf32>, vector<16x128xf32> -> vector<16x128xf32>
    %c0_13 = arith.constant 0 : index
    %c0_14 = arith.constant 0 : index
    %11 = vector.load %arg5[%c0_13, %c0_14] : memref<16x1xf32, #tpu.memory_space<vmem>>, vector<16x1xf32>
    %12 = vector.broadcast %11 : vector<16x1xf32> to vector<16x128xf32>
    %13 = arith.addf %10, %12 : vector<16x128xf32>
    %14 = vector.extract_strided_slice %13 {offsets = [0, 0], sizes = [8, 128], strides = [1, 1]} : vector<16x128xf32> to vector<8x128xf32>
    %cst_15 = arith.constant 0.000000e+00 : f32
    %15 = vector.broadcast %cst_15 : f32 to vector<8x128xf32>
    %16 = arith.maximumf %14, %15 : vector<8x128xf32>
    %17 = vector.extract_strided_slice %13 {offsets = [8, 0], sizes = [8, 128], strides = [1, 1]} : vector<16x128xf32> to vector<8x128xf32>
    %18 = tpu.concatenate %16, %17 in 0 : vector<8x128xf32>, vector<8x128xf32> -> vector<16x128xf32>
    %c0_16 = arith.constant 0 : index
    %c0_17 = arith.constant 0 : index
    %c0_18 = arith.constant 0 : index
    %19 = vector.load %arg6[%c0_16, %c0_17, %c0_18] : memref<1x16x128xf32, #tpu.memory_space<vmem>>, vector<1x16x128xf32>
    %20 = vector.shape_cast %19 : vector<1x16x128xf32> to vector<16x128xf32>
    %21 = vector.shape_cast %18 : vector<16x128xf32> to vector<1x16x128xf32>
    tpu.vector_store %arg6[%c0_16, %c0_17, %c0_18], %21 {strides = array<i32>} : memref<1x16x128xf32, #tpu.memory_space<vmem>>, vector<1x16x128xf32>,
    return
  }
  func.func @transform_0(%arg0: i32, %arg1: i32) -> (i32, i32, i32) {
    %c0_i32 = arith.constant 0 : i32
    %c0_i32_0 = arith.constant 0 : i32
    %c0_i32_1 = arith.constant 0 : i32
    return %arg0, %c0_i32, %c0_i32_0 : i32, i32, i32
  }
  func.func @transform_1(%arg0: i32, %arg1: i32) -> (i32, i32, i32, i32) {
    %c0_i32 = arith.constant 0 : i32
    %c0_i32_0 = arith.constant 0 : i32
    %c0_i32_1 = arith.constant 0 : i32
    return %arg0, %c0_i32, %c0_i32_0, %arg1 : i32, i32, i32, i32
  }
  func.func @transform_2(%arg0: i32, %arg1: i32) -> (i32, i32) {
    %c0_i32 = arith.constant 0 : i32
    %c0_i32_0 = arith.constant 0 : i32
    %c0_i32_1 = arith.constant 0 : i32
    return %c0_i32, %c0_i32_0 : i32, i32
  }
  func.func @transform_3(%arg0: i32, %arg1: i32) -> (i32, i32) {
    %c0_i32 = arith.constant 0 : i32
    %c0_i32_0 = arith.constant 0 : i32
    %c0_i32_1 = arith.constant 0 : i32
    return %c0_i32, %c0_i32_0 : i32, i32
  }
  func.func @transform_4(%arg0: i32, %arg1: i32) -> (i32, i32, i32) {
    %c0_i32 = arith.constant 0 : i32
    %c0_i32_0 = arith.constant 0 : i32
    return %arg0, %c0_i32, %arg1 : i32, i32, i32
  }
}

module attributes {stable_mosaic.version = 11 : i64} {
  func.func @_bn_apply_kernel(%arg0: i32, %arg1: i32, %arg2: memref<1x16x128xf32, #tpu.memory_space<vmem>>, %arg3: memref<16x1xf32, #tpu.memory_space<vmem>>, %arg4: memref<16x1xf32, #tpu.memory_space<vmem>>, %arg5: memref<1x16x128xf32, #tpu.memory_space<vmem>>) attributes {dimension_semantics = [#tpu.dimension_semantics<parallel>, #tpu.dimension_semantics<parallel>], iteration_bounds = array<i64: 2, 2>, scalar_prefetch = 0 : i64, scratch_operands = 0 : i64, tpu.core_type = #tpu.core_type<tc>, window_params = [{transform_indices = @transform_0, window_bounds = array<i64: 1, 16, 128>}, {pipeline_mode = #tpu.pipeline_mode<synchronous>, transform_indices = @transform_1, window_bounds = array<i64: 16, 1>}, {pipeline_mode = #tpu.pipeline_mode<synchronous>, transform_indices = @transform_2, window_bounds = array<i64: 16, 1>}, {transform_indices = @transform_3, window_bounds = array<i64: 1, 16, 128>}]} {
    %c0 = arith.constant 0 : index
    %c0_0 = arith.constant 0 : index
    %c0_1 = arith.constant 0 : index
    %0 = vector.load %arg2[%c0, %c0_0, %c0_1] : memref<1x16x128xf32, #tpu.memory_space<vmem>>, vector<1x16x128xf32>
    %1 = vector.shape_cast %0 : vector<1x16x128xf32> to vector<16x128xf32>
    %c0_2 = arith.constant 0 : index
    %c0_3 = arith.constant 0 : index
    %2 = vector.load %arg3[%c0_2, %c0_3] : memref<16x1xf32, #tpu.memory_space<vmem>>, vector<16x1xf32>
    %3 = vector.broadcast %2 : vector<16x1xf32> to vector<16x128xf32>
    %4 = arith.mulf %1, %3 : vector<16x128xf32>
    %c0_4 = arith.constant 0 : index
    %c0_5 = arith.constant 0 : index
    %5 = vector.load %arg4[%c0_4, %c0_5] : memref<16x1xf32, #tpu.memory_space<vmem>>, vector<16x1xf32>
    %6 = vector.broadcast %5 : vector<16x1xf32> to vector<16x128xf32>
    %7 = arith.addf %4, %6 : vector<16x128xf32>
    %c0_6 = arith.constant 0 : index
    %c0_7 = arith.constant 0 : index
    %c0_8 = arith.constant 0 : index
    %8 = vector.load %arg5[%c0_6, %c0_7, %c0_8] : memref<1x16x128xf32, #tpu.memory_space<vmem>>, vector<1x16x128xf32>
    %9 = vector.shape_cast %8 : vector<1x16x128xf32> to vector<16x128xf32>
    %10 = vector.shape_cast %7 : vector<16x128xf32> to vector<1x16x128xf32>
    tpu.vector_store %arg5[%c0_6, %c0_7, %c0_8], %10 {strides = array<i32>} : memref<1x16x128xf32, #tpu.memory_space<vmem>>, vector<1x16x128xf32>,
    return
  }
  func.func @transform_0(%arg0: i32, %arg1: i32) -> (i32, i32, i32) {
    %c0_i32 = arith.constant 0 : i32
    %c0_i32_0 = arith.constant 0 : i32
    return %arg0, %c0_i32, %arg1 : i32, i32, i32
  }
  func.func @transform_1(%arg0: i32, %arg1: i32) -> (i32, i32) {
    %c0_i32 = arith.constant 0 : i32
    %c0_i32_0 = arith.constant 0 : i32
    %c0_i32_1 = arith.constant 0 : i32
    return %c0_i32, %c0_i32_0 : i32, i32
  }
  func.func @transform_2(%arg0: i32, %arg1: i32) -> (i32, i32) {
    %c0_i32 = arith.constant 0 : i32
    %c0_i32_0 = arith.constant 0 : i32
    %c0_i32_1 = arith.constant 0 : i32
    return %c0_i32, %c0_i32_0 : i32, i32
  }
  func.func @transform_3(%arg0: i32, %arg1: i32) -> (i32, i32, i32) {
    %c0_i32 = arith.constant 0 : i32
    %c0_i32_0 = arith.constant 0 : i32
    return %arg0, %c0_i32, %arg1 : i32, i32, i32
  }
}

</mosaic_0001>

<llo_original>
// kernel: gnn_atomic_forward.3
$region0: #{gnn_atomic_forward.3}
  #allocation0 [shape = 'u32[]', space=smem, size = 0x4, offset = 0x4, fixed_abs, tag = 'smem constant byte address 0x4 - core index']
  #allocation1 [shape = 'u32[144,128]{1,0:T(1,128)}', space=vmem, size = 0x12000, scoped, tag = 'internal scratch']
  %s0 = inlined_call_operand.vmem [shape: f32[2,16,256], index: 0, kind: input, shape index: {}]
  %s1 = inlined_call_operand.vmem [shape: f32[16,1], index: 1, kind: input, shape index: {}]
  %s2 = inlined_call_operand.vmem [shape: f32[16,1], index: 2, kind: input, shape index: {}]
  %s3 = inlined_call_operand.vmem [shape: f32[2,16,256], index: 3, kind: output, shape index: {}]
  %s4 = sld [smem:[#allocation0]]
  $region117: #{gnn_atomic_forward.3} parent=0
    _
  %s6 = ssub.s32 1, %s4
  %s7 = scalar_select 0, %s6, %s4
  $region1: #{gnn_atomic_forward.3} parent=0
    #allocation2 [shape = 'u8[16384]{0}', space=vmem, size = 0x4000, scoped, tag = 'input window, operand 0']
    #allocation3 [shape = 'u8[16384]{0}', space=vmem, size = 0x4000, scoped, tag = 'output window, operand 0']
    loop: start=0, step=1, limit=6
    $region2: #{gnn_atomic_forward.3} parent=1 // loop_pre_header
      _
    $region3: #{gnn_atomic_forward.3} parent=1 // loop_header
      %s9 = sphi 0, %s13
      %p10 = scmp.ge.s32.totalorder %s9, 6
      %s16 = sphi 0, %s28
      %s17 = sphi 0, %s24
      %s18 = sphi 0, %s16
      %s19 = sphi 0, %s17
      %s20 = sphi 0, %s18
      %s21 = sphi 0, %s19
      %s33 = sphi 0, %s35
      %s36 = sphi 0, %s33
      %s37 = sphi 0, %s36
      %s53 = sphi 0, %s37
      %s57 = sphi 0, %s57
      %s59 = sphi 0, %s57
      %s60 = sphi 0, %s59
      %s74 = sphi 0, %s60
      %s78 = sphi 0, %s78
      %s80 = sphi 0, %s78
      %s81 = sphi 0, %s80
      %s95 = sphi 0, %s81
      %s103 = sphi 0, %s105
      %s106 = sphi 0, %s103
      %s107 = sphi 0, %s106
      %s123 = sphi 0, %s107
    $region4: #{gnn_atomic_forward.3} parent=1 // loop_header_branch
      %12 = sbr.rel (%p10) target = $region8
    $region5: #{gnn_atomic_forward.3} parent=1 // loop_body
      %s14 = ssub.s32 %s9, 1
      %s15 = ssub.s32 %s9, 2
      %s22 = sadd.s32 1, %s17
      %p23 = scmp.ge.s32.totalorder %s22, 2
      %s24 = scalar_select %p23, 0, %s22
      %s25 = sadd.s32 1, %s16
      %s26 = scalar_select %p23, %s25, %s16
      %p27 = scmp.ge.s32.totalorder %s26, 2
      %s28 = scalar_select %p27, 0, %s26
      %s29 = ssub.s32 %s16, %s28
      %s30 = ssub.s32 %s17, %s24
      %s31 = sor.u32 %s29, %s30
      %p32 = scmp.eq.s32.totalorder %s31, 0
      %s34 = sadd.s32 %s33, 1
      %s35 = scalar_select %p32, %s33, %s34
      %p38 = pneg %p32
      %p39 = scmp.eq.s32.totalorder %s9, 3
      %p40 = por %p38, %p39
      %p41 = scmp.ne.s32.totalorder %s33, %s36
      %p42 = scmp.eq.s32.totalorder %s9, 0
      %p43 = por %p41, %p42
      %p44 = scmp.ne.s32.totalorder %s33, %s36
      %p45 = scmp.eq.s32.totalorder %s14, 3
      %p46 = por %p44, %p45
      %p47 = scmp.ne.s32.totalorder %s36, %s37
      %p48 = scmp.eq.s32.totalorder %s14, 0
      %p49 = por %p47, %p48
      %p50 = scmp.ne.s32.totalorder %s36, %s37
      %p51 = scmp.eq.s32.totalorder %s15, 3
      %p52 = por %p50, %p51
      %p54 = scmp.ne.s32.totalorder %s37, %s53
      %p55 = scmp.eq.s32.totalorder %s15, 0
      %p56 = por %p54, %p55
      %s58 = sadd.s32 %s57, 1
      %p61 = scmp.eq.s32.totalorder %s9, 3
      %p62 = scmp.ne.s32.totalorder %s57, %s59
      %p63 = scmp.eq.s32.totalorder %s9, 0
      %p64 = por %p62, %p63
      %p65 = scmp.ne.s32.totalorder %s57, %s59
      %p66 = scmp.eq.s32.totalorder %s14, 3
      %p67 = por %p65, %p66
      %p68 = scmp.ne.s32.totalorder %s59, %s60
      %p69 = scmp.eq.s32.totalorder %s14, 0
      %p70 = por %p68, %p69
      %p71 = scmp.ne.s32.totalorder %s59, %s60
      %p72 = scmp.eq.s32.totalorder %s15, 3
      %p73 = por %p71, %p72
      %p75 = scmp.ne.s32.totalorder %s60, %s74
      %p76 = scmp.eq.s32.totalorder %s15, 0
      %p77 = por %p75, %p76
      %s79 = sadd.s32 %s78, 1
      %p82 = scmp.eq.s32.totalorder %s9, 3
      %p83 = scmp.ne.s32.totalorder %s78, %s80
      %p84 = scmp.eq.s32.totalorder %s9, 0
      %p85 = por %p83, %p84
      %p86 = scmp.ne.s32.totalorder %s78, %s80
      %p87 = scmp.eq.s32.totalorder %s14, 3
      %p88 = por %p86, %p87
      %p89 = scmp.ne.s32.totalorder %s80, %s81
      %p90 = scmp.eq.s32.totalorder %s14, 0
      %p91 = por %p89, %p90
      %p92 = scmp.ne.s32.totalorder %s80, %s81
      %p93 = scmp.eq.s32.totalorder %s15, 3
      %p94 = por %p92, %p93
      %p96 = scmp.ne.s32.totalorder %s81, %s95
      %p97 = scmp.eq.s32.totalorder %s15, 0
      %p98 = por %p96, %p97
      %s99 = ssub.s32 %s16, %s28
      %s100 = ssub.s32 %s17, %s24
      %s101 = sor.u32 %s99, %s100
      %p102 = scmp.eq.s32.totalorder %s101, 0
      %s104 = sadd.s32 %s103, 1
      %s105 = scalar_select %p102, %s103, %s104
      %p108 = pneg %p102
      %p109 = scmp.eq.s32.totalorder %s9, 3
      %p110 = por %p108, %p109
      %p111 = scmp.ne.s32.totalorder %s103, %s106
      %p112 = scmp.eq.s32.totalorder %s9, 0
      %p113 = por %p111, %p112
      %p114 = scmp.ne.s32.totalorder %s103, %s106
      %p115 = scmp.eq.s32.totalorder %s14, 3
      %p116 = por %p114, %p115
      %p117 = scmp.ne.s32.totalorder %s106, %s107
      %p118 = scmp.eq.s32.totalorder %s14, 0
      %p119 = por %p117, %p118
      %p120 = scmp.ne.s32.totalorder %s106, %s107
      %p121 = scmp.eq.s32.totalorder %s15, 3
      %p122 = por %p120, %p121
      %p124 = scmp.ne.s32.totalorder %s107, %s123
      %p125 = scmp.eq.s32.totalorder %s15, 0
      %p126 = por %p124, %p125
      %p127 = scmp.le.s32.totalorder 1, %s9
      %p128 = scmp.lt.s32.totalorder %s9, 5
      %p129 = pnand %p127, %p128
      %p130 = pneg %p129
      // Predicated region
      $region9: #{gnn_atomic_forward.3} parent=5 // pred_check
        _
      $region10: #{gnn_atomic_forward.3} parent=5 // pred_check_branch
        %132 = sbr.rel (%p129) target = $region12
      $region11: #{gnn_atomic_forward.3} parent=5 // pred_region
        %s133 = ssub.s32 %s9, 1
        // Predicated region
        $region13: #{gnn_atomic_forward.3} parent=11 // pred_check
          %p134 = pneg %p70
        $region14: #{gnn_atomic_forward.3} parent=11 // pred_check_branch
          %136 = sbr.rel (%p134) target = $region16
        $region15: #{gnn_atomic_forward.3} parent=11 // pred_region
          _
        $region16: #{gnn_atomic_forward.3} parent=11 // pred_fallthru
          _
        // Predicated region
        $region17: #{gnn_atomic_forward.3} parent=11 // pred_check
          %p137 = pneg %p91
        $region18: #{gnn_atomic_forward.3} parent=11 // pred_check_branch
          %139 = sbr.rel (%p137) target = $region20
        $region19: #{gnn_atomic_forward.3} parent=11 // pred_region
          _
        $region20: #{gnn_atomic_forward.3} parent=11 // pred_fallthru
          _
      $region12: #{gnn_atomic_forward.3} parent=5 // pred_fallthru
        _
      %p140 = scmp.lt.s32.totalorder %s9, 4
      // Predicated region
      $region21: #{gnn_atomic_forward.3} parent=5 // pred_check
        %p141 = pneg %p140
      $region22: #{gnn_atomic_forward.3} parent=5 // pred_check_branch
        %143 = sbr.rel (%p141) target = $region24
      $region23: #{gnn_atomic_forward.3} parent=5 // pred_region
        // Predicated region
        $region25: #{gnn_atomic_forward.3} parent=23 // pred_check
          %p144 = pneg %p43
        $region26: #{gnn_atomic_forward.3} parent=23 // pred_check_branch
          %146 = sbr.rel (%p144) target = $region28
        $region27: #{gnn_atomic_forward.3} parent=23 // pred_region
          %s147 = sand.u32 %s33, 1
          %s148 = sand.u32 %s33, 1
          %s149 = smul.addr %s148, 16
          %s150 = scalar_lea.vmem [#allocation2], %s149
          %s151 = smul.addr %s16, 4
          %s152 = sadd.s32 %s17, %s151
          %s153 = smul.addr %s152, 8
          %s154 = scalar_lea.vmem %s0, %s153
          // Predicated region
          $region29: #{gnn_atomic_forward.3} parent=27 // pred_check
            _
          $region30: #{gnn_atomic_forward.3} parent=27 // pred_check_branch
            %156 = sbr.rel (0) target = $region32
          $region31: #{gnn_atomic_forward.3} parent=27 // pred_region
            // Predicated region
            $region33: #{gnn_atomic_forward.3} parent=31 // pred_check
              _
            $region34: #{gnn_atomic_forward.3} parent=31 // pred_check_branch
              %158 = sbr.rel (0) target = $region36
            $region35: #{gnn_atomic_forward.3} parent=31 // pred_region
              // Predicated region
              $region48: #{gnn_atomic_forward.3} parent=35 // pred_check
                _
              $region49: #{gnn_atomic_forward.3} parent=35 // pred_check_branch
                %175 = sbr.rel (0) target = $region51
              $region50: #{gnn_atomic_forward.3} parent=35 // pred_region
                loop: start=0, step=1, limit=1
                $region52: #{gnn_atomic_forward.3} parent=50 // loop_pre_header
                  _
                $region53: #{gnn_atomic_forward.3} parent=50 // loop_header
                  %s177 = sphi 0, %s181
                  %p178 = scmp.ge.s32.totalorder %s177, 1
                  %s182 = sphi %s154, %s154
                  %s183 = sphi %s150, %s150
                $region54: #{gnn_atomic_forward.3} parent=50 // loop_header_branch
                  %180 = sbr.rel (%p178) target = $region58
                $region55: #{gnn_atomic_forward.3} parent=50 // loop_body
                  %v184 = vld [vmem:[%s182] sm:$0xff]
                  %185 = vst [vmem:[%s183] sm:$0xff] %v184
                  %v186 = vld [vmem:[%s182 + $0x10] sm:$0xff]
                  %187 = vst [vmem:[%s183 + $0x8] sm:$0xff] %v186
                $region56: #{gnn_atomic_forward.3} parent=50 // loop_footer
                  %s181 = sadd.s32 1, %s177
                $region57: #{gnn_atomic_forward.3} parent=50 // loop_footer_branch
                  %176 = sbr.rel target = $region53
                $region58: #{gnn_atomic_forward.3} parent=50 // loop_exit
                  _
              $region51: #{gnn_atomic_forward.3} parent=35 // pred_fallthru
                _
              // Predicated region
              $region59: #{gnn_atomic_forward.3} parent=35 // pred_check
                _
              $region60: #{gnn_atomic_forward.3} parent=35 // pred_check_branch
                %189 = sbr.rel target = $region62
              $region61: #{gnn_atomic_forward.3} parent=35 // pred_region
                _
              $region62: #{gnn_atomic_forward.3} parent=35 // pred_fallthru
                _
            $region36: #{gnn_atomic_forward.3} parent=31 // pred_fallthru
              _
            // Predicated region
            $region37: #{gnn_atomic_forward.3} parent=31 // pred_check
              _
            $region38: #{gnn_atomic_forward.3} parent=31 // pred_check_branch
              %160 = sbr.rel target = $region40
            $region39: #{gnn_atomic_forward.3} parent=31 // pred_region
              loop: start=0, step=1, limit=1
              $region41: #{gnn_atomic_forward.3} parent=39 // loop_pre_header
                _
              $region42: #{gnn_atomic_forward.3} parent=39 // loop_header
                %s163 = sphi 0, %s167
                %p164 = scmp.ge.s32.totalorder %s163, 1
                %s168 = sphi %s154, %s154
                %s169 = sphi %s150, %s150
              $region43: #{gnn_atomic_forward.3} parent=39 // loop_header_branch
                %166 = sbr.rel (%p164) target = $region47
              $region44: #{gnn_atomic_forward.3} parent=39 // loop_body
                %v170 = vld [vmem:[%s168] sm:$0xff]
                %171 = vst [vmem:[%s169] sm:$0xff] %v170
                %v172 = vld [vmem:[%s168 + $0x10] sm:$0xff]
                %173 = vst [vmem:[%s169 + $0x8] sm:$0xff] %v172
              $region45: #{gnn_atomic_forward.3} parent=39 // loop_footer
                %s167 = sadd.s32 1, %s163
              $region46: #{gnn_atomic_forward.3} parent=39 // loop_footer_branch
                %162 = sbr.rel target = $region42
              $region47: #{gnn_atomic_forward.3} parent=39 // loop_exit
                _
            $region40: #{gnn_atomic_forward.3} parent=31 // pred_fallthru
              _
          $region32: #{gnn_atomic_forward.3} parent=27 // pred_fallthru
            _
          %190 = vnop
        $region28: #{gnn_atomic_forward.3} parent=23 // pred_fallthru
          _
      $region24: #{gnn_atomic_forward.3} parent=5 // pred_fallthru
        _
      %p191 = scmp.le.s32.totalorder 1, %s9
      %p192 = scmp.lt.s32.totalorder %s9, 5
      %p193 = pnand %p191, %p192
      %p194 = pneg %p193
      // Predicated region
      $region63: #{gnn_atomic_forward.3} parent=5 // pred_check
        _
      $region64: #{gnn_atomic_forward.3} parent=5 // pred_check_branch
        %196 = sbr.rel (%p193) target = $region66
      $region65: #{gnn_atomic_forward.3} parent=5 // pred_region
        %s197 = ssub.s32 %s9, 1
        %s198 = sand.u32 %s36, 1
        %s199 = sand.u32 %s36, 1
        %s200 = smul.addr %s199, 16
        %s201 = scalar_lea.vmem [#allocation2], %s200
        // Predicated region
        $region67: #{gnn_atomic_forward.3} parent=65 // pred_check
          %p202 = pneg %p49
        $region68: #{gnn_atomic_forward.3} parent=65 // pred_check_branch
          %204 = sbr.rel (%p202) target = $region70
        $region69: #{gnn_atomic_forward.3} parent=65 // pred_region
          _
        $region70: #{gnn_atomic_forward.3} parent=65 // pred_fallthru
          _
        %s205 = sand.u32 %s36, 1
        %s206 = sand.u32 %s36, 1
        %s207 = smul.addr %s206, 16
        %s208 = scalar_lea.vmem [#allocation2], %s207
        %p209 = pneg %p49
        %p210 = pneg %p46
        %p211 = pneg %p70
        %p212 = pneg %p67
        %p213 = pneg %p91
        %p214 = pneg %p88
        %p215 = pneg %p119
        %p216 = pneg %p116
        %s217 = sand.u32 %s106, 1
        %s218 = sand.u32 %s106, 1
        %s219 = smul.addr %s218, 16
        %s220 = scalar_lea.vmem [#allocation3], %s219
        %v221 = vld [vmem:[%s201] sm:$0xff]
        %v222 = vld [vmem:[%s201 + $0x8] sm:$0xff]
        %v223 = vld [vmem:[%s1] sm:$0xff]
        %v224 = vld [vmem:[%s1 + $0x8] sm:$0xff]
        %226 = vset.pattern.permute.xlu0 0
        %227 = vperm.xlu0 %226, %v223
        %v228 = vpop.permute.xlu0 %227
        %231 = vset.pattern.permute.xlu0 0
        %232 = vperm.xlu0 %231, %v224
        %v233 = vpop.permute.xlu0 %232
        %v235 = vmul.f32 %v221, %v228
        %v236 = vmul.f32 %v222, %v233
        %v237 = vld [vmem:[%s2] sm:$0xff]
        %v238 = vld [vmem:[%s2 + $0x8] sm:$0xff]
        %240 = vset.pattern.permute.xlu0 0
        %241 = vperm.xlu0 %240, %v237
        %v242 = vpop.permute.xlu0 %241
        %245 = vset.pattern.permute.xlu0 0
        %246 = vperm.xlu0 %245, %v238
        %v247 = vpop.permute.xlu0 %246
        %v249 = vadd.f32 %v235, %v242
        %v250 = vadd.f32 %v236, %v247
        %251 = vst [vmem:[%s220] sm:$0xff] %v249
        %252 = vst [vmem:[%s220 + $0x8] sm:$0xff] %v250
        %s253 = sand.u32 %s106, 1
        %s254 = sand.u32 %s106, 1
        %s255 = smul.addr %s254, 16
        %s256 = scalar_lea.vmem [#allocation3], %s255
        // Predicated region
        $region71: #{gnn_atomic_forward.3} parent=65 // pred_check
          %p257 = pneg %p116
        $region72: #{gnn_atomic_forward.3} parent=65 // pred_check_branch
          %259 = sbr.rel (%p257) target = $region74
        $region73: #{gnn_atomic_forward.3} parent=65 // pred_region
          %s260 = smul.addr %s18, 4
          %s261 = sadd.s32 %s19, %s260
          %s262 = smul.addr %s261, 8
          %s263 = scalar_lea.vmem %s3, %s262
          // Predicated region
          $region75: #{gnn_atomic_forward.3} parent=73 // pred_check
            _
          $region76: #{gnn_atomic_forward.3} parent=73 // pred_check_branch
            %265 = sbr.rel (0) target = $region78
          $region77: #{gnn_atomic_forward.3} parent=73 // pred_region
            // Predicated region
            $region79: #{gnn_atomic_forward.3} parent=77 // pred_check
              _
            $region80: #{gnn_atomic_forward.3} parent=77 // pred_check_branch
              %267 = sbr.rel (0) target = $region82
            $region81: #{gnn_atomic_forward.3} parent=77 // pred_region
              // Predicated region
              $region94: #{gnn_atomic_forward.3} parent=81 // pred_check
                _
              $region95: #{gnn_atomic_forward.3} parent=81 // pred_check_branch
                %284 = sbr.rel (0) target = $region97
              $region96: #{gnn_atomic_forward.3} parent=81 // pred_region
                loop: start=0, step=1, limit=1
                $region98: #{gnn_atomic_forward.3} parent=96 // loop_pre_header
                  _
                $region99: #{gnn_atomic_forward.3} parent=96 // loop_header
                  %s286 = sphi 0, %s290
                  %p287 = scmp.ge.s32.totalorder %s286, 1
                  %s291 = sphi %s256, %s256
                  %s292 = sphi %s263, %s263
                $region100: #{gnn_atomic_forward.3} parent=96 // loop_header_branch
                  %289 = sbr.rel (%p287) target = $region104
                $region101: #{gnn_atomic_forward.3} parent=96 // loop_body
                  %v293 = vld [vmem:[%s291] sm:$0xff]
                  %294 = vst [vmem:[%s292] sm:$0xff] %v293
                  %v295 = vld [vmem:[%s291 + $0x8] sm:$0xff]
                  %296 = vst [vmem:[%s292 + $0x10] sm:$0xff] %v295
                $region102: #{gnn_atomic_forward.3} parent=96 // loop_footer
                  %s290 = sadd.s32 1, %s286
                $region103: #{gnn_atomic_forward.3} parent=96 // loop_footer_branch
                  %285 = sbr.rel target = $region99
                $region104: #{gnn_atomic_forward.3} parent=96 // loop_exit
                  _
              $region97: #{gnn_atomic_forward.3} parent=81 // pred_fallthru
                _
              // Predicated region
              $region105: #{gnn_atomic_forward.3} parent=81 // pred_check
                _
              $region106: #{gnn_atomic_forward.3} parent=81 // pred_check_branch
                %298 = sbr.rel target = $region108
              $region107: #{gnn_atomic_forward.3} parent=81 // pred_region
                _
              $region108: #{gnn_atomic_forward.3} parent=81 // pred_fallthru
                _
            $region82: #{gnn_atomic_forward.3} parent=77 // pred_fallthru
              _
            // Predicated region
            $region83: #{gnn_atomic_forward.3} parent=77 // pred_check
              _
            $region84: #{gnn_atomic_forward.3} parent=77 // pred_check_branch
              %269 = sbr.rel target = $region86
            $region85: #{gnn_atomic_forward.3} parent=77 // pred_region
              loop: start=0, step=1, limit=1
              $region87: #{gnn_atomic_forward.3} parent=85 // loop_pre_header
                _
              $region88: #{gnn_atomic_forward.3} parent=85 // loop_header
                %s272 = sphi 0, %s276
                %p273 = scmp.ge.s32.totalorder %s272, 1
                %s277 = sphi %s256, %s256
                %s278 = sphi %s263, %s263
              $region89: #{gnn_atomic_forward.3} parent=85 // loop_header_branch
                %275 = sbr.rel (%p273) target = $region93
              $region90: #{gnn_atomic_forward.3} parent=85 // loop_body
                %v279 = vld [vmem:[%s277] sm:$0xff]
                %280 = vst [vmem:[%s278] sm:$0xff] %v279
                %v281 = vld [vmem:[%s277 + $0x8] sm:$0xff]
                %282 = vst [vmem:[%s278 + $0x10] sm:$0xff] %v281
              $region91: #{gnn_atomic_forward.3} parent=85 // loop_footer
                %s276 = sadd.s32 1, %s272
              $region92: #{gnn_atomic_forward.3} parent=85 // loop_footer_branch
                %271 = sbr.rel target = $region88
              $region93: #{gnn_atomic_forward.3} parent=85 // loop_exit
                _
            $region86: #{gnn_atomic_forward.3} parent=77 // pred_fallthru
              _
          $region78: #{gnn_atomic_forward.3} parent=73 // pred_fallthru
            _
          %299 = vnop
        $region74: #{gnn_atomic_forward.3} parent=65 // pred_fallthru
          _
      $region66: #{gnn_atomic_forward.3} parent=5 // pred_fallthru
        _
      %p300 = scmp.le.s32.totalorder 2, %s9
      // Predicated region
      $region109: #{gnn_atomic_forward.3} parent=5 // pred_check
        %p301 = pneg %p300
      $region110: #{gnn_atomic_forward.3} parent=5 // pred_check_branch
        %303 = sbr.rel (%p301) target = $region112
      $region111: #{gnn_atomic_forward.3} parent=5 // pred_region
        %s304 = ssub.s32 %s9, 2
        // Predicated region
        $region113: #{gnn_atomic_forward.3} parent=111 // pred_check
          %p305 = pneg %p122
        $region114: #{gnn_atomic_forward.3} parent=111 // pred_check_branch
          %307 = sbr.rel (%p305) target = $region116
        $region115: #{gnn_atomic_forward.3} parent=111 // pred_region
          %s308 = sand.u32 %s107, 1
          %s309 = sand.u32 %s107, 1
          %s310 = smul.addr %s309, 16
          %s311 = scalar_lea.vmem [#allocation3], %s310
        $region116: #{gnn_atomic_forward.3} parent=111 // pred_fallthru
          _
      $region112: #{gnn_atomic_forward.3} parent=5 // pred_fallthru
        _
    $region6: #{gnn_atomic_forward.3} parent=1 // loop_footer
      %s13 = sadd.s32 1, %s9
    $region7: #{gnn_atomic_forward.3} parent=1 // loop_footer_branch
      %8 = sbr.rel target = $region3
    $region8: #{gnn_atomic_forward.3} parent=1 // loop_exit
      _

// kernel: gnn_atomic_forward.4
$region0: #{gnn_atomic_forward.4}
  #allocation0 [shape = 'u32[]', space=smem, size = 0x4, offset = 0x4, fixed_abs, tag = 'smem constant byte address 0x4 - core index']
  #allocation1 [shape = 'u32[144,128]{1,0:T(1,128)}', space=vmem, size = 0x12000, scoped, tag = 'internal scratch']
  %s0 = inlined_call_operand.vmem [shape: f32[16,16], index: 0, kind: input, shape index: {}]
  %s1 = inlined_call_operand.vmem [shape: f32[16,1], index: 1, kind: input, shape index: {}]
  %s2 = inlined_call_operand.hbm [shape: f32[2,256,256,2], index: 2, kind: input, shape index: {}]
  %s3 = inlined_call_operand.hbm [shape: f32[2,8,256,1], index: 3, kind: input, shape index: {}]
  %s4 = inlined_call_operand.vmem [shape: f32[2,16,256], index: 4, kind: output, shape index: {}]
  %s5 = sld [smem:[#allocation0]]
  $region91: #{gnn_atomic_forward.4} parent=0
    _
  %s7 = ssub.s32 1, %s5
  %s8 = scalar_select 0, %s7, %s5
  $region1: #{gnn_atomic_forward.4} parent=0
    #allocation2 [shape = 'u8[16384]{0}', space=vmem, size = 0x4000, scoped, tag = 'operand span for operand 3']
    #allocation3 [shape = 's32[2]{0}', space=sflag, size = 0x8, scoped, tag = 'scoped memory for gnn_atomic_forward.4']
    #allocation4 [shape = 'u8[524288]{0}', space=vmem, size = 0x80000, scoped, tag = 'operand span for operand 2']
    #allocation5 [shape = 's32[2]{0}', space=sflag, size = 0x8, scoped, tag = 'scoped memory for gnn_atomic_forward.4']
    #allocation6 [shape = 'u8[16384]{0}', space=vmem, size = 0x4000, scoped, tag = 'output window, operand 0']
    %9 = vsyncpa [#allocation3], 0
    %s10 = scalar_lea.sflag [#allocation3], 1
    %11 = vsyncpa %s10, 0
    %12 = vsyncpa [#allocation5], 0
    %s13 = scalar_lea.sflag [#allocation5], 1
    %14 = vsyncpa %s13, 0
    loop: start=0, step=1, limit=6
    $region2: #{gnn_atomic_forward.4} parent=1 // loop_pre_header
      _
    $region3: #{gnn_atomic_forward.4} parent=1 // loop_header
      %s16 = sphi 0, %s20
      %p17 = scmp.ge.s32.totalorder %s16, 6
      %s23 = sphi 0, %s35
      %s24 = sphi 0, %s31
      %s25 = sphi 0, %s23
      %s26 = sphi 0, %s24
      %s27 = sphi 0, %s25
      %s28 = sphi 0, %s26
      %s40 = sphi 0, %s42
      %s43 = sphi 0, %s40
      %s44 = sphi 0, %s43
      %s60 = sphi 0, %s44
      %s74 = sphi 0, %s76
      %s77 = sphi 0, %s74
      %s78 = sphi 0, %s77
      %s94 = sphi 0, %s78
      %s98 = sphi 0, %s98
      %s100 = sphi 0, %s98
      %s101 = sphi 0, %s100
      %s115 = sphi 0, %s101
      %s119 = sphi 0, %s119
      %s121 = sphi 0, %s119
      %s122 = sphi 0, %s121
      %s136 = sphi 0, %s122
      %s144 = sphi 0, %s146
      %s147 = sphi 0, %s144
      %s148 = sphi 0, %s147
      %s164 = sphi 0, %s148
    $region4: #{gnn_atomic_forward.4} parent=1 // loop_header_branch
      %19 = sbr.rel (%p17) target = $region8
    $region5: #{gnn_atomic_forward.4} parent=1 // loop_body
      %s21 = ssub.s32 %s16, 1
      %s22 = ssub.s32 %s16, 2
      %s29 = sadd.s32 1, %s24
      %p30 = scmp.ge.s32.totalorder %s29, 2
      %s31 = scalar_select %p30, 0, %s29
      %s32 = sadd.s32 1, %s23
      %s33 = scalar_select %p30, %s32, %s23
      %p34 = scmp.ge.s32.totalorder %s33, 2
      %s35 = scalar_select %p34, 0, %s33
      %s38 = ssub.s32 %s23, %s35
      %p39 = scmp.eq.s32.totalorder %s38, 0
      %s41 = sadd.s32 %s40, 1
      %s42 = scalar_select %p39, %s40, %s41
      %p45 = pneg %p39
      %p46 = scmp.eq.s32.totalorder %s16, 3
      %p47 = por %p45, %p46
      %p48 = scmp.ne.s32.totalorder %s40, %s43
      %p49 = scmp.eq.s32.totalorder %s16, 0
      %p50 = por %p48, %p49
      %p51 = scmp.ne.s32.totalorder %s40, %s43
      %p52 = scmp.eq.s32.totalorder %s21, 3
      %p53 = por %p51, %p52
      %p54 = scmp.ne.s32.totalorder %s43, %s44
      %p55 = scmp.eq.s32.totalorder %s21, 0
      %p56 = por %p54, %p55
      %p57 = scmp.ne.s32.totalorder %s43, %s44
      %p58 = scmp.eq.s32.totalorder %s22, 3
      %p59 = por %p57, %p58
      %p61 = scmp.ne.s32.totalorder %s44, %s60
      %p62 = scmp.eq.s32.totalorder %s22, 0
      %p63 = por %p61, %p62
      %s65 = smul.u32 %s24, 128
      %s66 = sshrl.u32 %s65, 7
      %s68 = smul.u32 %s31, 128
      %s69 = sshrl.u32 %s68, 7
      %s70 = ssub.s32 %s23, %s35
      %s71 = ssub.s32 %s66, %s69
      %s72 = sor.u32 %s70, %s71
      %p73 = scmp.eq.s32.totalorder %s72, 0
      %s75 = sadd.s32 %s74, 1
      %s76 = scalar_select %p73, %s74, %s75
      %p79 = pneg %p73
      %p80 = scmp.eq.s32.totalorder %s16, 3
      %p81 = por %p79, %p80
      %p82 = scmp.ne.s32.totalorder %s74, %s77
      %p83 = scmp.eq.s32.totalorder %s16, 0
      %p84 = por %p82, %p83
      %p85 = scmp.ne.s32.totalorder %s74, %s77
      %p86 = scmp.eq.s32.totalorder %s21, 3
      %p87 = por %p85, %p86
      %p88 = scmp.ne.s32.totalorder %s77, %s78
      %p89 = scmp.eq.s32.totalorder %s21, 0
      %p90 = por %p88, %p89
      %p91 = scmp.ne.s32.totalorder %s77, %s78
      %p92 = scmp.eq.s32.totalorder %s22, 3
      %p93 = por %p91, %p92
      %p95 = scmp.ne.s32.totalorder %s78, %s94
      %p96 = scmp.eq.s32.totalorder %s22, 0
      %p97 = por %p95, %p96
      %s99 = sadd.s32 %s98, 1
      %p102 = scmp.eq.s32.totalorder %s16, 3
      %p103 = scmp.ne.s32.totalorder %s98, %s100
      %p104 = scmp.eq.s32.totalorder %s16, 0
      %p105 = por %p103, %p104
      %p106 = scmp.ne.s32.totalorder %s98, %s100
      %p107 = scmp.eq.s32.totalorder %s21, 3
      %p108 = por %p106, %p107
      %p109 = scmp.ne.s32.totalorder %s100, %s101
      %p110 = scmp.eq.s32.totalorder %s21, 0
      %p111 = por %p109, %p110
      %p112 = scmp.ne.s32.totalorder %s100, %s101
      %p113 = scmp.eq.s32.totalorder %s22, 3
      %p114 = por %p112, %p113
      %p116 = scmp.ne.s32.totalorder %s101, %s115
      %p117 = scmp.eq.s32.totalorder %s22, 0
      %p118 = por %p116, %p117
      %s120 = sadd.s32 %s119, 1
      %p123 = scmp.eq.s32.totalorder %s16, 3
      %p124 = scmp.ne.s32.totalorder %s119, %s121
      %p125 = scmp.eq.s32.totalorder %s16, 0
      %p126 = por %p124, %p125
      %p127 = scmp.ne.s32.totalorder %s119, %s121
      %p128 = scmp.eq.s32.totalorder %s21, 3
      %p129 = por %p127, %p128
      %p130 = scmp.ne.s32.totalorder %s121, %s122
      %p131 = scmp.eq.s32.totalorder %s21, 0
      %p132 = por %p130, %p131
      %p133 = scmp.ne.s32.totalorder %s121, %s122
      %p134 = scmp.eq.s32.totalorder %s22, 3
      %p135 = por %p133, %p134
      %p137 = scmp.ne.s32.totalorder %s122, %s136
      %p138 = scmp.eq.s32.totalorder %s22, 0
      %p139 = por %p137, %p138
      %s140 = ssub.s32 %s23, %s35
      %s141 = ssub.s32 %s24, %s31
      %s142 = sor.u32 %s140, %s141
      %p143 = scmp.eq.s32.totalorder %s142, 0
      %s145 = sadd.s32 %s144, 1
      %s146 = scalar_select %p143, %s144, %s145
      %p149 = pneg %p143
      %p150 = scmp.eq.s32.totalorder %s16, 3
      %p151 = por %p149, %p150
      %p152 = scmp.ne.s32.totalorder %s144, %s147
      %p153 = scmp.eq.s32.totalorder %s16, 0
      %p154 = por %p152, %p153
      %p155 = scmp.ne.s32.totalorder %s144, %s147
      %p156 = scmp.eq.s32.totalorder %s21, 3
      %p157 = por %p155, %p156
      %p158 = scmp.ne.s32.totalorder %s147, %s148
      %p159 = scmp.eq.s32.totalorder %s21, 0
      %p160 = por %p158, %p159
      %p161 = scmp.ne.s32.totalorder %s147, %s148
      %p162 = scmp.eq.s32.totalorder %s22, 3
      %p163 = por %p161, %p162
      %p165 = scmp.ne.s32.totalorder %s148, %s164
      %p166 = scmp.eq.s32.totalorder %s22, 0
      %p167 = por %p165, %p166
      %p168 = scmp.le.s32.totalorder 1, %s16
      %p169 = scmp.lt.s32.totalorder %s16, 5
      %p170 = pnand %p168, %p169
      %p171 = pneg %p170
      // Predicated region
      $region9: #{gnn_atomic_forward.4} parent=5 // pred_check
        _
      $region10: #{gnn_atomic_forward.4} parent=5 // pred_check_branch
        %173 = sbr.rel (%p170) target = $region12
      $region11: #{gnn_atomic_forward.4} parent=5 // pred_region
        %s174 = ssub.s32 %s16, 1
        // Predicated region
        $region13: #{gnn_atomic_forward.4} parent=11 // pred_check
          %p175 = pneg %p111
        $region14: #{gnn_atomic_forward.4} parent=11 // pred_check_branch
          %177 = sbr.rel (%p175) target = $region16
        $region15: #{gnn_atomic_forward.4} parent=11 // pred_region
          _
        $region16: #{gnn_atomic_forward.4} parent=11 // pred_fallthru
          _
        // Predicated region
        $region17: #{gnn_atomic_forward.4} parent=11 // pred_check
          %p178 = pneg %p132
        $region18: #{gnn_atomic_forward.4} parent=11 // pred_check_branch
          %180 = sbr.rel (%p178) target = $region20
        $region19: #{gnn_atomic_forward.4} parent=11 // pred_region
          _
        $region20: #{gnn_atomic_forward.4} parent=11 // pred_fallthru
          _
      $region12: #{gnn_atomic_forward.4} parent=5 // pred_fallthru
        _
      %p181 = scmp.lt.s32.totalorder %s16, 4
      // Predicated region
      $region21: #{gnn_atomic_forward.4} parent=5 // pred_check
        %p182 = pneg %p181
      $region22: #{gnn_atomic_forward.4} parent=5 // pred_check_branch
        %184 = sbr.rel (%p182) target = $region24
      $region23: #{gnn_atomic_forward.4} parent=5 // pred_region
        // Predicated region
        $region25: #{gnn_atomic_forward.4} parent=23 // pred_check
          %p185 = pneg %p50
        $region26: #{gnn_atomic_forward.4} parent=23 // pred_check_branch
          %187 = sbr.rel (%p185) target = $region28
        $region27: #{gnn_atomic_forward.4} parent=23 // pred_region
          %s188 = sand.u32 %s40, 1
          %s189 = scalar_lea.sflag [#allocation3], %s188
          %s190 = sand.u32 %s40, 1
          %s191 = smul.addr %s190, 16
          %s192 = scalar_lea.vmem [#allocation2], %s191
          %s195 = ssub.s32 256, 256
          %196 = vsyncadd %s189, %s195
          %s197 = smul.addr %s23, 16
          %s198 = smul.addr %s197, 16
          %s199 = scalar_lea.hbm %s3, %s198
          %s200 = sshll.u32 %s192, 4
          %s201 = int_to_ptr.vmem [resolvable:$true] %s200
          %206 = dma.hbm_to_vmem [thread:$0]  %s199, 256, %s201, %s189, 32, 32, 2
        $region28: #{gnn_atomic_forward.4} parent=23 // pred_fallthru
          _
        // Predicated region
        $region29: #{gnn_atomic_forward.4} parent=23 // pred_check
          %p207 = pneg %p84
        $region30: #{gnn_atomic_forward.4} parent=23 // pred_check_branch
          %209 = sbr.rel (%p207) target = $region32
        $region31: #{gnn_atomic_forward.4} parent=23 // pred_region
          %s210 = sand.u32 %s74, 1
          %s211 = scalar_lea.sflag [#allocation5], %s210
          %s212 = sand.u32 %s74, 1
          %s213 = smul.addr %s212, 512
          %s214 = scalar_lea.vmem [#allocation4], %s213
          %s216 = smul.u32 %s24, 128
          %s217 = sshrl.u32 %s216, 7
          %s219 = ssub.s32 8192, 8192
          %220 = vsyncadd %s211, %s219
          %s221 = smul.addr %s23, 512
          %s222 = sadd.s32 %s217, %s221
          %s223 = smul.addr %s222, 32
          %s224 = scalar_lea.hbm %s2, %s223
          %s225 = sshll.u32 %s214, 4
          %s226 = int_to_ptr.vmem [resolvable:$true] %s225
          %231 = dma.hbm_to_vmem [thread:$0]  %s224, 8192, %s226, %s211, 64, 32, 2
        $region32: #{gnn_atomic_forward.4} parent=23 // pred_fallthru
          _
      $region24: #{gnn_atomic_forward.4} parent=5 // pred_fallthru
        _
      %p232 = scmp.le.s32.totalorder 1, %s16
      %p233 = scmp.lt.s32.totalorder %s16, 5
      %p234 = pnand %p232, %p233
      %p235 = pneg %p234
      // Predicated region
      $region33: #{gnn_atomic_forward.4} parent=5 // pred_check
        _
      $region34: #{gnn_atomic_forward.4} parent=5 // pred_check_branch
        %237 = sbr.rel (%p234) target = $region36
      $region35: #{gnn_atomic_forward.4} parent=5 // pred_region
        #allocation7 [shape = 'u8[4096]{0}', space=vmem, size = 0x1000, dematerialized = true, scoped, tag = 'FusionAdapter Buffer %fusion.4 = bf16[2,8,256]{2,1,0:T(8,128)(2,1)} fusion(%param_3.2), kind=kLoop, calls=%fused_computation.5.clone.clone, metadata={op_name="jit(gnn_atomic_forward)/convert_element_type" stack_frame_id=8}']
        #allocation8 [shape = 'u8[131072]{0}', space=vmem, size = 0x20000, dematerialized = true, scoped, tag = 'FusionAdapter Buffer %fusion.2 = bf16[2,2,256,256]{3,2,1,0:T(8,128)(2,1)} fusion(%param_2.4), kind=kLoop, calls=%fused_computation.1.clone.clone, metadata={op_name="jit(gnn_atomic_forward)/convert_element_type" stack_frame_id=9}']
        %s238 = ssub.s32 %s16, 1
        %s239 = sand.u32 %s43, 1
        %s240 = scalar_lea.sflag [#allocation3], %s239
        %s241 = sand.u32 %s43, 1
        %s242 = smul.addr %s241, 16
        %s243 = scalar_lea.vmem [#allocation2], %s242
        // Predicated region
        $region37: #{gnn_atomic_forward.4} parent=35 // pred_check
          %p244 = pneg %p56
        $region38: #{gnn_atomic_forward.4} parent=35 // pred_check_branch
          %246 = sbr.rel (%p244) target = $region40
        $region39: #{gnn_atomic_forward.4} parent=35 // pred_region
          %247 = dma.done %s240, 256
        $region40: #{gnn_atomic_forward.4} parent=35 // pred_fallthru
          _
        %s248 = sand.u32 %s77, 1
        %s249 = scalar_lea.sflag [#allocation5], %s248
        %s250 = sand.u32 %s77, 1
        %s251 = smul.addr %s250, 512
        %s252 = scalar_lea.vmem [#allocation4], %s251
        // Predicated region
        $region41: #{gnn_atomic_forward.4} parent=35 // pred_check
          %p253 = pneg %p90
        $region42: #{gnn_atomic_forward.4} parent=35 // pred_check_branch
          %255 = sbr.rel (%p253) target = $region44
        $region43: #{gnn_atomic_forward.4} parent=35 // pred_region
          %256 = dma.done %s249, 8192
        $region44: #{gnn_atomic_forward.4} parent=35 // pred_fallthru
          _
        %s257 = sand.u32 %s43, 1
        %s258 = scalar_lea.sflag [#allocation3], %s257
        %s259 = sand.u32 %s43, 1
        %s260 = smul.addr %s259, 16
        %s261 = scalar_lea.vmem [#allocation2], %s260
        %p262 = pneg %p56
        %p263 = pneg %p53
        %s264 = sand.u32 %s77, 1
        %s265 = scalar_lea.sflag [#allocation5], %s264
        %s266 = sand.u32 %s77, 1
        %s267 = smul.addr %s266, 512
        %s268 = scalar_lea.vmem [#allocation4], %s267
        %p269 = pneg %p90
        %p270 = pneg %p87
        %p271 = pneg %p111
        %p272 = pneg %p108
        %p273 = pneg %p132
        %p274 = pneg %p129
        %p275 = pneg %p160
        %p276 = pneg %p157
        %s277 = sand.u32 %s147, 1
        %s278 = sand.u32 %s147, 1
        %s279 = smul.addr %s278, 16
        %s280 = scalar_lea.vmem [#allocation6], %s279
        %s283 = smul.u32 %s26, 128
        %s284 = sshrl.u32 %s283, 7
        %s285 = scalar_lea.vmem %s243, 16 [#allocation2]
        %s286 = scalar_lea.vmem %s285, 4294967295 [#allocation2]
        %s287 = scalar_lea.vmem %s243, 14 [#allocation2]
        %p288 = scmp.lt.s32.totalorder %s286, %s287
        %s289 = scalar_select %p288, 0, 255
        %v290 = vld [vmem:[%s243] ss:$2 sm:%s289]
        %v291 = vpack.c.bf16 0.0, %v290
        %293 = vst [vmem:[#allocation7] sm:$0xf] %v291
        %s294 = scalar_lea.vmem %s243, 1 [#allocation2]
        %s295 = scalar_lea.vmem %s294, 14 [#allocation2]
        %p296 = scmp.lt.s32.totalorder %s286, %s295
        %s297 = scalar_select %p296, 0, 255
        %v298 = vld [vmem:[%s294] ss:$2 sm:%s297]
        %s299 = scalar_lea.vmem [#allocation7], 4
        %v300 = vpack.c.bf16 0.0, %v298
        %302 = vst [vmem:[%s299] sm:$0xf] %v300
        %s303 = scalar_lea.vmem %s252, 512 [#allocation4]
        %s304 = scalar_lea.vmem %s303, 4294967295 [#allocation4]
        %s305 = smul.addr %s26, 128
        %s306 = scalar_lea.vmem %s252, 14 [#allocation4]
        %p307 = scmp.lt.s32.totalorder %s304, %s306
        %s308 = scalar_select %p307, 0, 255
        %v309 = vld [vmem:[%s252] ss:$2 sm:%s308]
        %v310 = vpack.c.bf16 0.0, %v309
        %312 = vst [vmem:[#allocation8] sm:$0xf] %v310
        %s313 = scalar_lea.vmem %s252, 16 [#allocation4]
        %s314 = scalar_lea.vmem %s313, 14 [#allocation4]
        %p315 = scmp.lt.s32.totalorder %s304, %s314
        %s316 = scalar_select %p315, 0, 255
        %v317 = vld [vmem:[%s313] ss:$2 sm:%s316]
        %s318 = scalar_lea.vmem [#allocation8], 4
        %v319 = vpack.c.bf16 0.0, %v317
        %321 = vst [vmem:[%s318] sm:$0xf] %v319
        %s322 = scalar_lea.vmem %s252, 32 [#allocation4]
        %s323 = scalar_lea.vmem %s322, 14 [#allocation4]
        %p324 = scmp.lt.s32.totalorder %s304, %s323
        %s325 = scalar_select %p324, 0, 255
        %v326 = vld [vmem:[%s322] ss:$2 sm:%s325]
        %s327 = scalar_lea.vmem [#allocation8], 8
        %v328 = vpack.c.bf16 0.0, %v326
        %330 = vst [vmem:[%s327] sm:$0xf] %v328
        %s331 = scalar_lea.vmem %s252, 48 [#allocation4]
        %s332 = scalar_lea.vmem %s331, 14 [#allocation4]
        %p333 = scmp.lt.s32.totalorder %s304, %s332
        %s334 = scalar_select %p333, 0, 255
        %v335 = vld [vmem:[%s331] ss:$2 sm:%s334]
        %s336 = scalar_lea.vmem [#allocation8], 12
        %v337 = vpack.c.bf16 0.0, %v335
        %339 = vst [vmem:[%s336] sm:$0xf] %v337
        %s340 = scalar_lea.vmem %s252, 64 [#allocation4]
        %s341 = scalar_lea.vmem %s340, 14 [#allocation4]
        %p342 = scmp.lt.s32.totalorder %s304, %s341
        %s343 = scalar_select %p342, 0, 255
        %v344 = vld [vmem:[%s340] ss:$2 sm:%s343]
        %s345 = scalar_lea.vmem [#allocation8], 16
        %v346 = vpack.c.bf16 0.0, %v344
        %348 = vst [vmem:[%s345] sm:$0xf] %v346
        %s349 = scalar_lea.vmem %s252, 80 [#allocation4]
        %s350 = scalar_lea.vmem %s349, 14 [#allocation4]
        %p351 = scmp.lt.s32.totalorder %s304, %s350
        %s352 = scalar_select %p351, 0, 255
        %v353 = vld [vmem:[%s349] ss:$2 sm:%s352]
        %s354 = scalar_lea.vmem [#allocation8], 20
        %v355 = vpack.c.bf16 0.0, %v353
        %357 = vst [vmem:[%s354] sm:$0xf] %v355
        %s358 = scalar_lea.vmem %s252, 96 [#allocation4]
        %s359 = scalar_lea.vmem %s358, 14 [#allocation4]
        %p360 = scmp.lt.s32.totalorder %s304, %s359
        %s361 = scalar_select %p360, 0, 255
        %v362 = vld [vmem:[%s358] ss:$2 sm:%s361]
        %s363 = scalar_lea.vmem [#allocation8], 24
        %v364 = vpack.c.bf16 0.0, %v362
        %366 = vst [vmem:[%s363] sm:$0xf] %v364
        %s367 = scalar_lea.vmem %s252, 112 [#allocation4]
        %s368 = scalar_lea.vmem %s367, 14 [#allocation4]
        %p369 = scmp.lt.s32.totalorder %s304, %s368
        %s370 = scalar_select %p369, 0, 255
        %v371 = vld [vmem:[%s367] ss:$2 sm:%s370]
        %s372 = scalar_lea.vmem [#allocation8], 28
        %v373 = vpack.c.bf16 0.0, %v371
        %375 = vst [vmem:[%s372] sm:$0xf] %v373
        %s376 = scalar_lea.vmem %s252, 128 [#allocation4]
        %s377 = scalar_lea.vmem %s376, 14 [#allocation4]
        %p378 = scmp.lt.s32.totalorder %s304, %s377
        %s379 = scalar_select %p378, 0, 255
        %v380 = vld [vmem:[%s376] ss:$2 sm:%s379]
        %s381 = scalar_lea.vmem [#allocation8], 32
        %v382 = vpack.c.bf16 0.0, %v380
        %384 = vst [vmem:[%s381] sm:$0xf] %v382
        %s385 = scalar_lea.vmem %s252, 144 [#allocation4]
        %s386 = scalar_lea.vmem %s385, 14 [#allocation4]
        %p387 = scmp.lt.s32.totalorder %s304, %s386
        %s388 = scalar_select %p387, 0, 255
        %v389 = vld [vmem:[%s385] ss:$2 sm:%s388]
        %s390 = scalar_lea.vmem [#allocation8], 36
        %v391 = vpack.c.bf16 0.0, %v389
        %393 = vst [vmem:[%s390] sm:$0xf] %v391
        %s394 = scalar_lea.vmem %s252, 160 [#allocation4]
        %s395 = scalar_lea.vmem %s394, 14 [#allocation4]
        %p396 = scmp.lt.s32.totalorder %s304, %s395
        %s397 = scalar_select %p396, 0, 255
        %v398 = vld [vmem:[%s394] ss:$2 sm:%s397]
        %s399 = scalar_lea.vmem [#allocation8], 40
        %v400 = vpack.c.bf16 0.0, %v398
        %402 = vst [vmem:[%s399] sm:$0xf] %v400
        %s403 = scalar_lea.vmem %s252, 176 [#allocation4]
        %s404 = scalar_lea.vmem %s403, 14 [#allocation4]
        %p405 = scmp.lt.s32.totalorder %s304, %s404
        %s406 = scalar_select %p405, 0, 255
        %v407 = vld [vmem:[%s403] ss:$2 sm:%s406]
        %s408 = scalar_lea.vmem [#allocation8], 44
        %v409 = vpack.c.bf16 0.0, %v407
        %411 = vst [vmem:[%s408] sm:$0xf] %v409
        %s412 = scalar_lea.vmem %s252, 192 [#allocation4]
        %s413 = scalar_lea.vmem %s412, 14 [#allocation4]
        %p414 = scmp.lt.s32.totalorder %s304, %s413
        %s415 = scalar_select %p414, 0, 255
        %v416 = vld [vmem:[%s412] ss:$2 sm:%s415]
        %s417 = scalar_lea.vmem [#allocation8], 48
        %v418 = vpack.c.bf16 0.0, %v416
        %420 = vst [vmem:[%s417] sm:$0xf] %v418
        %s421 = scalar_lea.vmem %s252, 208 [#allocation4]
        %s422 = scalar_lea.vmem %s421, 14 [#allocation4]
        %p423 = scmp.lt.s32.totalorder %s304, %s422
        %s424 = scalar_select %p423, 0, 255
        %v425 = vld [vmem:[%s421] ss:$2 sm:%s424]
        %s426 = scalar_lea.vmem [#allocation8], 52
        %v427 = vpack.c.bf16 0.0, %v425
        %429 = vst [vmem:[%s426] sm:$0xf] %v427
        %s430 = scalar_lea.vmem %s252, 224 [#allocation4]
        %s431 = scalar_lea.vmem %s430, 14 [#allocation4]
        %p432 = scmp.lt.s32.totalorder %s304, %s431
        %s433 = scalar_select %p432, 0, 255
        %v434 = vld [vmem:[%s430] ss:$2 sm:%s433]
        %s435 = scalar_lea.vmem [#allocation8], 56
        %v436 = vpack.c.bf16 0.0, %v434
        %438 = vst [vmem:[%s435] sm:$0xf] %v436
        %s439 = scalar_lea.vmem %s252, 240 [#allocation4]
        %s440 = scalar_lea.vmem %s439, 14 [#allocation4]
        %p441 = scmp.lt.s32.totalorder %s304, %s440
        %s442 = scalar_select %p441, 0, 255
        %v443 = vld [vmem:[%s439] ss:$2 sm:%s442]
        %s444 = scalar_lea.vmem [#allocation8], 60
        %v445 = vpack.c.bf16 0.0, %v443
        %447 = vst [vmem:[%s444] sm:$0xf] %v445
        %s448 = scalar_lea.vmem %s252, 256 [#allocation4]
        %s449 = scalar_lea.vmem %s448, 14 [#allocation4]
        %p450 = scmp.lt.s32.totalorder %s304, %s449
        %s451 = scalar_select %p450, 0, 255
        %v452 = vld [vmem:[%s448] ss:$2 sm:%s451]
        %s453 = scalar_lea.vmem [#allocation8], 64
        %v454 = vpack.c.bf16 0.0, %v452
        %456 = vst [vmem:[%s453] sm:$0xf] %v454
        %s457 = scalar_lea.vmem %s252, 272 [#allocation4]
        %s458 = scalar_lea.vmem %s457, 14 [#allocation4]
        %p459 = scmp.lt.s32.totalorder %s304, %s458
        %s460 = scalar_select %p459, 0, 255
        %v461 = vld [vmem:[%s457] ss:$2 sm:%s460]
        %s462 = scalar_lea.vmem [#allocation8], 68
        %v463 = vpack.c.bf16 0.0, %v461
        %465 = vst [vmem:[%s462] sm:$0xf] %v463
        %s466 = scalar_lea.vmem %s252, 288 [#allocation4]
        %s467 = scalar_lea.vmem %s466, 14 [#allocation4]
        %p468 = scmp.lt.s32.totalorder %s304, %s467
        %s469 = scalar_select %p468, 0, 255
        %v470 = vld [vmem:[%s466] ss:$2 sm:%s469]
        %s471 = scalar_lea.vmem [#allocation8], 72
        %v472 = vpack.c.bf16 0.0, %v470
        %474 = vst [vmem:[%s471] sm:$0xf] %v472
        %s475 = scalar_lea.vmem %s252, 304 [#allocation4]
        %s476 = scalar_lea.vmem %s475, 14 [#allocation4]
        %p477 = scmp.lt.s32.totalorder %s304, %s476
        %s478 = scalar_select %p477, 0, 255
        %v479 = vld [vmem:[%s475] ss:$2 sm:%s478]
        %s480 = scalar_lea.vmem [#allocation8], 76
        %v481 = vpack.c.bf16 0.0, %v479
        %483 = vst [vmem:[%s480] sm:$0xf] %v481
        %s484 = scalar_lea.vmem %s252, 320 [#allocation4]
        %s485 = scalar_lea.vmem %s484, 14 [#allocation4]
        %p486 = scmp.lt.s32.totalorder %s304, %s485
        %s487 = scalar_select %p486, 0, 255
        %v488 = vld [vmem:[%s484] ss:$2 sm:%s487]
        %s489 = scalar_lea.vmem [#allocation8], 80
        %v490 = vpack.c.bf16 0.0, %v488
        %492 = vst [vmem:[%s489] sm:$0xf] %v490
        %s493 = scalar_lea.vmem %s252, 336 [#allocation4]
        %s494 = scalar_lea.vmem %s493, 14 [#allocation4]
        %p495 = scmp.lt.s32.totalorder %s304, %s494
        %s496 = scalar_select %p495, 0, 255
        %v497 = vld [vmem:[%s493] ss:$2 sm:%s496]
        %s498 = scalar_lea.vmem [#allocation8], 84
        %v499 = vpack.c.bf16 0.0, %v497
        %501 = vst [vmem:[%s498] sm:$0xf] %v499
        %s502 = scalar_lea.vmem %s252, 352 [#allocation4]
        %s503 = scalar_lea.vmem %s502, 14 [#allocation4]
        %p504 = scmp.lt.s32.totalorder %s304, %s503
        %s505 = scalar_select %p504, 0, 255
        %v506 = vld [vmem:[%s502] ss:$2 sm:%s505]
        %s507 = scalar_lea.vmem [#allocation8], 88
        %v508 = vpack.c.bf16 0.0, %v506
        %510 = vst [vmem:[%s507] sm:$0xf] %v508
        %s511 = scalar_lea.vmem %s252, 368 [#allocation4]
        %s512 = scalar_lea.vmem %s511, 14 [#allocation4]
        %p513 = scmp.lt.s32.totalorder %s304, %s512
        %s514 = scalar_select %p513, 0, 255
        %v515 = vld [vmem:[%s511] ss:$2 sm:%s514]
        %s516 = scalar_lea.vmem [#allocation8], 92
        %v517 = vpack.c.bf16 0.0, %v515
        %519 = vst [vmem:[%s516] sm:$0xf] %v517
        %s520 = scalar_lea.vmem %s252, 384 [#allocation4]
        %s521 = scalar_lea.vmem %s520, 14 [#allocation4]
        %p522 = scmp.lt.s32.totalorder %s304, %s521
        %s523 = scalar_select %p522, 0, 255
        %v524 = vld [vmem:[%s520] ss:$2 sm:%s523]
        %s525 = scalar_lea.vmem [#allocation8], 96
        %v526 = vpack.c.bf16 0.0, %v524
        %528 = vst [vmem:[%s525] sm:$0xf] %v526
        %s529 = scalar_lea.vmem %s252, 400 [#allocation4]
        %s530 = scalar_lea.vmem %s529, 14 [#allocation4]
        %p531 = scmp.lt.s32.totalorder %s304, %s530
        %s532 = scalar_select %p531, 0, 255
        %v533 = vld [vmem:[%s529] ss:$2 sm:%s532]
        %s534 = scalar_lea.vmem [#allocation8], 100
        %v535 = vpack.c.bf16 0.0, %v533
        %537 = vst [vmem:[%s534] sm:$0xf] %v535
        %s538 = scalar_lea.vmem %s252, 416 [#allocation4]
        %s539 = scalar_lea.vmem %s538, 14 [#allocation4]
        %p540 = scmp.lt.s32.totalorder %s304, %s539
        %s541 = scalar_select %p540, 0, 255
        %v542 = vld [vmem:[%s538] ss:$2 sm:%s541]
        %s543 = scalar_lea.vmem [#allocation8], 104
        %v544 = vpack.c.bf16 0.0, %v542
        %546 = vst [vmem:[%s543] sm:$0xf] %v544
        %s547 = scalar_lea.vmem %s252, 432 [#allocation4]
        %s548 = scalar_lea.vmem %s547, 14 [#allocation4]
        %p549 = scmp.lt.s32.totalorder %s304, %s548
        %s550 = scalar_select %p549, 0, 255
        %v551 = vld [vmem:[%s547] ss:$2 sm:%s550]
        %s552 = scalar_lea.vmem [#allocation8], 108
        %v553 = vpack.c.bf16 0.0, %v551
        %555 = vst [vmem:[%s552] sm:$0xf] %v553
        %s556 = scalar_lea.vmem %s252, 448 [#allocation4]
        %s557 = scalar_lea.vmem %s556, 14 [#allocation4]
        %p558 = scmp.lt.s32.totalorder %s304, %s557
        %s559 = scalar_select %p558, 0, 255
        %v560 = vld [vmem:[%s556] ss:$2 sm:%s559]
        %s561 = scalar_lea.vmem [#allocation8], 112
        %v562 = vpack.c.bf16 0.0, %v560
        %564 = vst [vmem:[%s561] sm:$0xf] %v562
        %s565 = scalar_lea.vmem %s252, 464 [#allocation4]
        %s566 = scalar_lea.vmem %s565, 14 [#allocation4]
        %p567 = scmp.lt.s32.totalorder %s304, %s566
        %s568 = scalar_select %p567, 0, 255
        %v569 = vld [vmem:[%s565] ss:$2 sm:%s568]
        %s570 = scalar_lea.vmem [#allocation8], 116
        %v571 = vpack.c.bf16 0.0, %v569
        %573 = vst [vmem:[%s570] sm:$0xf] %v571
        %s574 = scalar_lea.vmem %s252, 480 [#allocation4]
        %s575 = scalar_lea.vmem %s574, 14 [#allocation4]
        %p576 = scmp.lt.s32.totalorder %s304, %s575
        %s577 = scalar_select %p576, 0, 255
        %v578 = vld [vmem:[%s574] ss:$2 sm:%s577]
        %s579 = scalar_lea.vmem [#allocation8], 120
        %v580 = vpack.c.bf16 0.0, %v578
        %582 = vst [vmem:[%s579] sm:$0xf] %v580
        %s583 = scalar_lea.vmem %s252, 496 [#allocation4]
        %s584 = scalar_lea.vmem %s583, 14 [#allocation4]
        %p585 = scmp.lt.s32.totalorder %s304, %s584
        %s586 = scalar_select %p585, 0, 255
        %v587 = vld [vmem:[%s583] ss:$2 sm:%s586]
        %s588 = scalar_lea.vmem [#allocation8], 124
        %v589 = vpack.c.bf16 0.0, %v587
        %591 = vst [vmem:[%s588] sm:$0xf] %v589
        %s592 = scalar_lea.vmem %s252, 1 [#allocation4]
        %s593 = scalar_lea.vmem %s592, 14 [#allocation4]
        %p594 = scmp.lt.s32.totalorder %s304, %s593
        %s595 = scalar_select %p594, 0, 255
        %v596 = vld [vmem:[%s592] ss:$2 sm:%s595]
        %s597 = scalar_lea.vmem [#allocation8], 128
        %v598 = vpack.c.bf16 0.0, %v596
        %600 = vst [vmem:[%s597] sm:$0xf] %v598
        %s601 = scalar_lea.vmem %s252, 16 [#allocation4]
        %s602 = scalar_lea.vmem %s601, 1 [#allocation4]
        %s603 = scalar_lea.vmem %s602, 14 [#allocation4]
        %p604 = scmp.lt.s32.totalorder %s304, %s603
        %s605 = scalar_select %p604, 0, 255
        %v606 = vld [vmem:[%s602] ss:$2 sm:%s605]
        %s607 = scalar_lea.vmem [#allocation8], 132
        %v608 = vpack.c.bf16 0.0, %v606
        %610 = vst [vmem:[%s607] sm:$0xf] %v608
        %s611 = scalar_lea.vmem %s252, 32 [#allocation4]
        %s612 = scalar_lea.vmem %s611, 1 [#allocation4]
        %s613 = scalar_lea.vmem %s612, 14 [#allocation4]
        %p614 = scmp.lt.s32.totalorder %s304, %s613
        %s615 = scalar_select %p614, 0, 255
        %v616 = vld [vmem:[%s612] ss:$2 sm:%s615]
        %s617 = scalar_lea.vmem [#allocation8], 136
        %v618 = vpack.c.bf16 0.0, %v616
        %620 = vst [vmem:[%s617] sm:$0xf] %v618
        %s621 = scalar_lea.vmem %s252, 48 [#allocation4]
        %s622 = scalar_lea.vmem %s621, 1 [#allocation4]
        %s623 = scalar_lea.vmem %s622, 14 [#allocation4]
        %p624 = scmp.lt.s32.totalorder %s304, %s623
        %s625 = scalar_select %p624, 0, 255
        %v626 = vld [vmem:[%s622] ss:$2 sm:%s625]
        %s627 = scalar_lea.vmem [#allocation8], 140
        %v628 = vpack.c.bf16 0.0, %v626
        %630 = vst [vmem:[%s627] sm:$0xf] %v628
        %s631 = scalar_lea.vmem %s252, 64 [#allocation4]
        %s632 = scalar_lea.vmem %s631, 1 [#allocation4]
        %s633 = scalar_lea.vmem %s632, 14 [#allocation4]
        %p634 = scmp.lt.s32.totalorder %s304, %s633
        %s635 = scalar_select %p634, 0, 255
        %v636 = vld [vmem:[%s632] ss:$2 sm:%s635]
        %s637 = scalar_lea.vmem [#allocation8], 144
        %v638 = vpack.c.bf16 0.0, %v636
        %640 = vst [vmem:[%s637] sm:$0xf] %v638
        %s641 = scalar_lea.vmem %s252, 80 [#allocation4]
        %s642 = scalar_lea.vmem %s641, 1 [#allocation4]
        %s643 = scalar_lea.vmem %s642, 14 [#allocation4]
        %p644 = scmp.lt.s32.totalorder %s304, %s643
        %s645 = scalar_select %p644, 0, 255
        %v646 = vld [vmem:[%s642] ss:$2 sm:%s645]
        %s647 = scalar_lea.vmem [#allocation8], 148
        %v648 = vpack.c.bf16 0.0, %v646
        %650 = vst [vmem:[%s647] sm:$0xf] %v648
        %s651 = scalar_lea.vmem %s252, 96 [#allocation4]
        %s652 = scalar_lea.vmem %s651, 1 [#allocation4]
        %s653 = scalar_lea.vmem %s652, 14 [#allocation4]
        %p654 = scmp.lt.s32.totalorder %s304, %s653
        %s655 = scalar_select %p654, 0, 255
        %v656 = vld [vmem:[%s652] ss:$2 sm:%s655]
        %s657 = scalar_lea.vmem [#allocation8], 152
        %v658 = vpack.c.bf16 0.0, %v656
        %660 = vst [vmem:[%s657] sm:$0xf] %v658
        %s661 = scalar_lea.vmem %s252, 112 [#allocation4]
        %s662 = scalar_lea.vmem %s661, 1 [#allocation4]
        %s663 = scalar_lea.vmem %s662, 14 [#allocation4]
        %p664 = scmp.lt.s32.totalorder %s304, %s663
        %s665 = scalar_select %p664, 0, 255
        %v666 = vld [vmem:[%s662] ss:$2 sm:%s665]
        %s667 = scalar_lea.vmem [#allocation8], 156
        %v668 = vpack.c.bf16 0.0, %v666
        %670 = vst [vmem:[%s667] sm:$0xf] %v668
        %s671 = scalar_lea.vmem %s252, 128 [#allocation4]
        %s672 = scalar_lea.vmem %s671, 1 [#allocation4]
        %s673 = scalar_lea.vmem %s672, 14 [#allocation4]
        %p674 = scmp.lt.s32.totalorder %s304, %s673
        %s675 = scalar_select %p674, 0, 255
        %v676 = vld [vmem:[%s672] ss:$2 sm:%s675]
        %s677 = scalar_lea.vmem [#allocation8], 160
        %v678 = vpack.c.bf16 0.0, %v676
        %680 = vst [vmem:[%s677] sm:$0xf] %v678
        %s681 = scalar_lea.vmem %s252, 144 [#allocation4]
        %s682 = scalar_lea.vmem %s681, 1 [#allocation4]
        %s683 = scalar_lea.vmem %s682, 14 [#allocation4]
        %p684 = scmp.lt.s32.totalorder %s304, %s683
        %s685 = scalar_select %p684, 0, 255
        %v686 = vld [vmem:[%s682] ss:$2 sm:%s685]
        %s687 = scalar_lea.vmem [#allocation8], 164
        %v688 = vpack.c.bf16 0.0, %v686
        %690 = vst [vmem:[%s687] sm:$0xf] %v688
        %s691 = scalar_lea.vmem %s252, 160 [#allocation4]
        %s692 = scalar_lea.vmem %s691, 1 [#allocation4]
        %s693 = scalar_lea.vmem %s692, 14 [#allocation4]
        %p694 = scmp.lt.s32.totalorder %s304, %s693
        %s695 = scalar_select %p694, 0, 255
        %v696 = vld [vmem:[%s692] ss:$2 sm:%s695]
        %s697 = scalar_lea.vmem [#allocation8], 168
        %v698 = vpack.c.bf16 0.0, %v696
        %700 = vst [vmem:[%s697] sm:$0xf] %v698
        %s701 = scalar_lea.vmem %s252, 176 [#allocation4]
        %s702 = scalar_lea.vmem %s701, 1 [#allocation4]
        %s703 = scalar_lea.vmem %s702, 14 [#allocation4]
        %p704 = scmp.lt.s32.totalorder %s304, %s703
        %s705 = scalar_select %p704, 0, 255
        %v706 = vld [vmem:[%s702] ss:$2 sm:%s705]
        %s707 = scalar_lea.vmem [#allocation8], 172
        %v708 = vpack.c.bf16 0.0, %v706
        %710 = vst [vmem:[%s707] sm:$0xf] %v708
        %s711 = scalar_lea.vmem %s252, 192 [#allocation4]
        %s712 = scalar_lea.vmem %s711, 1 [#allocation4]
        %s713 = scalar_lea.vmem %s712, 14 [#allocation4]
        %p714 = scmp.lt.s32.totalorder %s304, %s713
        %s715 = scalar_select %p714, 0, 255
        %v716 = vld [vmem:[%s712] ss:$2 sm:%s715]
        %s717 = scalar_lea.vmem [#allocation8], 176
        %v718 = vpack.c.bf16 0.0, %v716
        %720 = vst [vmem:[%s717] sm:$0xf] %v718
        %s721 = scalar_lea.vmem %s252, 208 [#allocation4]
        %s722 = scalar_lea.vmem %s721, 1 [#allocation4]
        %s723 = scalar_lea.vmem %s722, 14 [#allocation4]
        %p724 = scmp.lt.s32.totalorder %s304, %s723
        %s725 = scalar_select %p724, 0, 255
        %v726 = vld [vmem:[%s722] ss:$2 sm:%s725]
        %s727 = scalar_lea.vmem [#allocation8], 180
        %v728 = vpack.c.bf16 0.0, %v726
        %730 = vst [vmem:[%s727] sm:$0xf] %v728
        %s731 = scalar_lea.vmem %s252, 224 [#allocation4]
        %s732 = scalar_lea.vmem %s731, 1 [#allocation4]
        %s733 = scalar_lea.vmem %s732, 14 [#allocation4]
        %p734 = scmp.lt.s32.totalorder %s304, %s733
        %s735 = scalar_select %p734, 0, 255
        %v736 = vld [vmem:[%s732] ss:$2 sm:%s735]
        %s737 = scalar_lea.vmem [#allocation8], 184
        %v738 = vpack.c.bf16 0.0, %v736
        %740 = vst [vmem:[%s737] sm:$0xf] %v738
        %s741 = scalar_lea.vmem %s252, 240 [#allocation4]
        %s742 = scalar_lea.vmem %s741, 1 [#allocation4]
        %s743 = scalar_lea.vmem %s742, 14 [#allocation4]
        %p744 = scmp.lt.s32.totalorder %s304, %s743
        %s745 = scalar_select %p744, 0, 255
        %v746 = vld [vmem:[%s742] ss:$2 sm:%s745]
        %s747 = scalar_lea.vmem [#allocation8], 188
        %v748 = vpack.c.bf16 0.0, %v746
        %750 = vst [vmem:[%s747] sm:$0xf] %v748
        %s751 = scalar_lea.vmem %s252, 256 [#allocation4]
        %s752 = scalar_lea.vmem %s751, 1 [#allocation4]
        %s753 = scalar_lea.vmem %s752, 14 [#allocation4]
        %p754 = scmp.lt.s32.totalorder %s304, %s753
        %s755 = scalar_select %p754, 0, 255
        %v756 = vld [vmem:[%s752] ss:$2 sm:%s755]
        %s757 = scalar_lea.vmem [#allocation8], 192
        %v758 = vpack.c.bf16 0.0, %v756
        %760 = vst [vmem:[%s757] sm:$0xf] %v758
        %s761 = scalar_lea.vmem %s252, 272 [#allocation4]
        %s762 = scalar_lea.vmem %s761, 1 [#allocation4]
        %s763 = scalar_lea.vmem %s762, 14 [#allocation4]
        %p764 = scmp.lt.s32.totalorder %s304, %s763
        %s765 = scalar_select %p764, 0, 255
        %v766 = vld [vmem:[%s762] ss:$2 sm:%s765]
        %s767 = scalar_lea.vmem [#allocation8], 196
        %v768 = vpack.c.bf16 0.0, %v766
        %770 = vst [vmem:[%s767] sm:$0xf] %v768
        %s771 = scalar_lea.vmem %s252, 288 [#allocation4]
        %s772 = scalar_lea.vmem %s771, 1 [#allocation4]
        %s773 = scalar_lea.vmem %s772, 14 [#allocation4]
        %p774 = scmp.lt.s32.totalorder %s304, %s773
        %s775 = scalar_select %p774, 0, 255
        %v776 = vld [vmem:[%s772] ss:$2 sm:%s775]
        %s777 = scalar_lea.vmem [#allocation8], 200
        %v778 = vpack.c.bf16 0.0, %v776
        %780 = vst [vmem:[%s777] sm:$0xf] %v778
        %s781 = scalar_lea.vmem %s252, 304 [#allocation4]
        %s782 = scalar_lea.vmem %s781, 1 [#allocation4]
        %s783 = scalar_lea.vmem %s782, 14 [#allocation4]
        %p784 = scmp.lt.s32.totalorder %s304, %s783
        %s785 = scalar_select %p784, 0, 255
        %v786 = vld [vmem:[%s782] ss:$2 sm:%s785]
        %s787 = scalar_lea.vmem [#allocation8], 204
        %v788 = vpack.c.bf16 0.0, %v786
        %790 = vst [vmem:[%s787] sm:$0xf] %v788
        %s791 = scalar_lea.vmem %s252, 320 [#allocation4]
        %s792 = scalar_lea.vmem %s791, 1 [#allocation4]
        %s793 = scalar_lea.vmem %s792, 14 [#allocation4]
        %p794 = scmp.lt.s32.totalorder %s304, %s793
        %s795 = scalar_select %p794, 0, 255
        %v796 = vld [vmem:[%s792] ss:$2 sm:%s795]
        %s797 = scalar_lea.vmem [#allocation8], 208
        %v798 = vpack.c.bf16 0.0, %v796
        %800 = vst [vmem:[%s797] sm:$0xf] %v798
        %s801 = scalar_lea.vmem %s252, 336 [#allocation4]
        %s802 = scalar_lea.vmem %s801, 1 [#allocation4]
        %s803 = scalar_lea.vmem %s802, 14 [#allocation4]
        %p804 = scmp.lt.s32.totalorder %s304, %s803
        %s805 = scalar_select %p804, 0, 255
        %v806 = vld [vmem:[%s802] ss:$2 sm:%s805]
        %s807 = scalar_lea.vmem [#allocation8], 212
        %v808 = vpack.c.bf16 0.0, %v806
        %810 = vst [vmem:[%s807] sm:$0xf] %v808
        %s811 = scalar_lea.vmem %s252, 352 [#allocation4]
        %s812 = scalar_lea.vmem %s811, 1 [#allocation4]
        %s813 = scalar_lea.vmem %s812, 14 [#allocation4]
        %p814 = scmp.lt.s32.totalorder %s304, %s813
        %s815 = scalar_select %p814, 0, 255
        %v816 = vld [vmem:[%s812] ss:$2 sm:%s815]
        %s817 = scalar_lea.vmem [#allocation8], 216
        %v818 = vpack.c.bf16 0.0, %v816
        %820 = vst [vmem:[%s817] sm:$0xf] %v818
        %s821 = scalar_lea.vmem %s252, 368 [#allocation4]
        %s822 = scalar_lea.vmem %s821, 1 [#allocation4]
        %s823 = scalar_lea.vmem %s822, 14 [#allocation4]
        %p824 = scmp.lt.s32.totalorder %s304, %s823
        %s825 = scalar_select %p824, 0, 255
        %v826 = vld [vmem:[%s822] ss:$2 sm:%s825]
        %s827 = scalar_lea.vmem [#allocation8], 220
        %v828 = vpack.c.bf16 0.0, %v826
        %830 = vst [vmem:[%s827] sm:$0xf] %v828
        %s831 = scalar_lea.vmem %s252, 384 [#allocation4]
        %s832 = scalar_lea.vmem %s831, 1 [#allocation4]
        %s833 = scalar_lea.vmem %s832, 14 [#allocation4]
        %p834 = scmp.lt.s32.totalorder %s304, %s833
        %s835 = scalar_select %p834, 0, 255
        %v836 = vld [vmem:[%s832] ss:$2 sm:%s835]
        %s837 = scalar_lea.vmem [#allocation8], 224
        %v838 = vpack.c.bf16 0.0, %v836
        %840 = vst [vmem:[%s837] sm:$0xf] %v838
        %s841 = scalar_lea.vmem %s252, 400 [#allocation4]
        %s842 = scalar_lea.vmem %s841, 1 [#allocation4]
        %s843 = scalar_lea.vmem %s842, 14 [#allocation4]
        %p844 = scmp.lt.s32.totalorder %s304, %s843
        %s845 = scalar_select %p844, 0, 255
        %v846 = vld [vmem:[%s842] ss:$2 sm:%s845]
        %s847 = scalar_lea.vmem [#allocation8], 228
        %v848 = vpack.c.bf16 0.0, %v846
        %850 = vst [vmem:[%s847] sm:$0xf] %v848
        %s851 = scalar_lea.vmem %s252, 416 [#allocation4]
        %s852 = scalar_lea.vmem %s851, 1 [#allocation4]
        %s853 = scalar_lea.vmem %s852, 14 [#allocation4]
        %p854 = scmp.lt.s32.totalorder %s304, %s853
        %s855 = scalar_select %p854, 0, 255
        %v856 = vld [vmem:[%s852] ss:$2 sm:%s855]
        %s857 = scalar_lea.vmem [#allocation8], 232
        %v858 = vpack.c.bf16 0.0, %v856
        %860 = vst [vmem:[%s857] sm:$0xf] %v858
        %s861 = scalar_lea.vmem %s252, 432 [#allocation4]
        %s862 = scalar_lea.vmem %s861, 1 [#allocation4]
        %s863 = scalar_lea.vmem %s862, 14 [#allocation4]
        %p864 = scmp.lt.s32.totalorder %s304, %s863
        %s865 = scalar_select %p864, 0, 255
        %v866 = vld [vmem:[%s862] ss:$2 sm:%s865]
        %s867 = scalar_lea.vmem [#allocation8], 236
        %v868 = vpack.c.bf16 0.0, %v866
        %870 = vst [vmem:[%s867] sm:$0xf] %v868
        %s871 = scalar_lea.vmem %s252, 448 [#allocation4]
        %s872 = scalar_lea.vmem %s871, 1 [#allocation4]
        %s873 = scalar_lea.vmem %s872, 14 [#allocation4]
        %p874 = scmp.lt.s32.totalorder %s304, %s873
        %s875 = scalar_select %p874, 0, 255
        %v876 = vld [vmem:[%s872] ss:$2 sm:%s875]
        %s877 = scalar_lea.vmem [#allocation8], 240
        %v878 = vpack.c.bf16 0.0, %v876
        %880 = vst [vmem:[%s877] sm:$0xf] %v878
        %s881 = scalar_lea.vmem %s252, 464 [#allocation4]
        %s882 = scalar_lea.vmem %s881, 1 [#allocation4]
        %s883 = scalar_lea.vmem %s882, 14 [#allocation4]
        %p884 = scmp.lt.s32.totalorder %s304, %s883
        %s885 = scalar_select %p884, 0, 255
        %v886 = vld [vmem:[%s882] ss:$2 sm:%s885]
        %s887 = scalar_lea.vmem [#allocation8], 244
        %v888 = vpack.c.bf16 0.0, %v886
        %890 = vst [vmem:[%s887] sm:$0xf] %v888
        %s891 = scalar_lea.vmem %s252, 480 [#allocation4]
        %s892 = scalar_lea.vmem %s891, 1 [#allocation4]
        %s893 = scalar_lea.vmem %s892, 14 [#allocation4]
        %p894 = scmp.lt.s32.totalorder %s304, %s893
        %s895 = scalar_select %p894, 0, 255
        %v896 = vld [vmem:[%s892] ss:$2 sm:%s895]
        %s897 = scalar_lea.vmem [#allocation8], 248
        %v898 = vpack.c.bf16 0.0, %v896
        %900 = vst [vmem:[%s897] sm:$0xf] %v898
        %s901 = scalar_lea.vmem %s252, 496 [#allocation4]
        %s902 = scalar_lea.vmem %s901, 1 [#allocation4]
        %s903 = scalar_lea.vmem %s902, 14 [#allocation4]
        %p904 = scmp.lt.s32.totalorder %s304, %s903
        %s905 = scalar_select %p904, 0, 255
        %v906 = vld [vmem:[%s902] ss:$2 sm:%s905]
        %s907 = scalar_lea.vmem [#allocation8], 252
        %v908 = vpack.c.bf16 0.0, %v906
        %910 = vst [vmem:[%s907] sm:$0xf] %v908
        %v912 = vld [vmem:[#allocation7] sm:$0xff]
        %v913 = vld [vmem:[#allocation8] sm:$0xf]
        %v914 = vld [vmem:[#allocation8 + $0x4] sm:$0xf]
        %v915 = vld [vmem:[#allocation8 + $0x8] sm:$0xf]
        %v916 = vld [vmem:[#allocation8 + $0xc] sm:$0xf]
        %v917 = vld [vmem:[#allocation8 + $0x10] sm:$0xf]
        %v918 = vld [vmem:[#allocation8 + $0x14] sm:$0xf]
        %v919 = vld [vmem:[#allocation8 + $0x18] sm:$0xf]
        %v920 = vld [vmem:[#allocation8 + $0x1c] sm:$0xf]
        %v921 = vld [vmem:[#allocation8 + $0x20] sm:$0xf]
        %v922 = vld [vmem:[#allocation8 + $0x24] sm:$0xf]
        %v923 = vld [vmem:[#allocation8 + $0x28] sm:$0xf]
        %v924 = vld [vmem:[#allocation8 + $0x2c] sm:$0xf]
        %v925 = vld [vmem:[#allocation8 + $0x30] sm:$0xf]
        %v926 = vld [vmem:[#allocation8 + $0x34] sm:$0xf]
        %v927 = vld [vmem:[#allocation8 + $0x38] sm:$0xf]
        %v928 = vld [vmem:[#allocation8 + $0x3c] sm:$0xf]
        %v929 = vld [vmem:[#allocation8 + $0x40] sm:$0xf]
        %v930 = vld [vmem:[#allocation8 + $0x44] sm:$0xf]
        %v931 = vld [vmem:[#allocation8 + $0x48] sm:$0xf]
        %v932 = vld [vmem:[#allocation8 + $0x4c] sm:$0xf]
        %v933 = vld [vmem:[#allocation8 + $0x50] sm:$0xf]
        %v934 = vld [vmem:[#allocation8 + $0x54] sm:$0xf]
        %v935 = vld [vmem:[#allocation8 + $0x58] sm:$0xf]
        %v936 = vld [vmem:[#allocation8 + $0x5c] sm:$0xf]
        %v937 = vld [vmem:[#allocation8 + $0x60] sm:$0xf]
        %v938 = vld [vmem:[#allocation8 + $0x64] sm:$0xf]
        %v939 = vld [vmem:[#allocation8 + $0x68] sm:$0xf]
        %v940 = vld [vmem:[#allocation8 + $0x6c] sm:$0xf]
        %v941 = vld [vmem:[#allocation8 + $0x70] sm:$0xf]
        %v942 = vld [vmem:[#allocation8 + $0x74] sm:$0xf]
        %v943 = vld [vmem:[#allocation8 + $0x78] sm:$0xf]
        %v944 = vld [vmem:[#allocation8 + $0x7c] sm:$0xf]
        %v946 = vunpack.c.l.b16 %v912
        %v947 = vunpack.c.h.b16 %v912
        %v948 = vpack.c.b16 %v946, %v946
        %v949 = vpack.c.b16 %v947, %v947
        %v984 = vunpack.c.l.b16 %v913
        %v985 = vunpack.c.l.b16 %v914
        %v986 = vunpack.c.l.b16 %v915
        %v987 = vunpack.c.l.b16 %v916
        %v988 = vunpack.c.l.b16 %v917
        %v989 = vunpack.c.l.b16 %v918
        %v990 = vunpack.c.l.b16 %v919
        %v991 = vunpack.c.l.b16 %v920
        %v992 = vunpack.c.l.b16 %v921
        %v993 = vunpack.c.l.b16 %v922
        %v994 = vunpack.c.l.b16 %v923
        %v995 = vunpack.c.l.b16 %v924
        %v996 = vunpack.c.l.b16 %v925
        %v997 = vunpack.c.l.b16 %v926
        %v998 = vunpack.c.l.b16 %v927
        %v999 = vunpack.c.l.b16 %v928
        %v1000 = vunpack.c.l.b16 %v929
        %v1001 = vunpack.c.l.b16 %v930
        %v1002 = vunpack.c.l.b16 %v931
        %v1003 = vunpack.c.l.b16 %v932
        %v1004 = vunpack.c.l.b16 %v933
        %v1005 = vunpack.c.l.b16 %v934
        %v1006 = vunpack.c.l.b16 %v935
        %v1007 = vunpack.c.l.b16 %v936
        %v1008 = vunpack.c.l.b16 %v937
        %v1009 = vunpack.c.l.b16 %v938
        %v1010 = vunpack.c.l.b16 %v939
        %v1011 = vunpack.c.l.b16 %v940
        %v1012 = vunpack.c.l.b16 %v941
        %v1013 = vunpack.c.l.b16 %v942
        %v1014 = vunpack.c.l.b16 %v943
        %v1015 = vunpack.c.l.b16 %v944
        %v1016 = vpack.c.b16 %v985, %v984
        %v1017 = vpack.c.b16 %v987, %v986
        %v1018 = vpack.c.b16 %v989, %v988
        %v1019 = vpack.c.b16 %v991, %v990
        %v1020 = vpack.c.b16 %v993, %v992
        %v1021 = vpack.c.b16 %v995, %v994
        %v1022 = vpack.c.b16 %v997, %v996
        %v1023 = vpack.c.b16 %v999, %v998
        %v1024 = vpack.c.b16 %v1001, %v1000
        %v1025 = vpack.c.b16 %v1003, %v1002
        %v1026 = vpack.c.b16 %v1005, %v1004
        %v1027 = vpack.c.b16 %v1007, %v1006
        %v1028 = vpack.c.b16 %v1009, %v1008
        %v1029 = vpack.c.b16 %v1011, %v1010
        %v1030 = vpack.c.b16 %v1013, %v1012
        %v1031 = vpack.c.b16 %v1015, %v1014
        %1048 = vmatprep.subr.bf16.mxu0 0
        %1049 = vmatpush1.bf16.msra.mxu0 %v1016
        %1050 = vmatprep.subr.bf16.mxu0 0
        %1051 = vmatpush1.bf16.msra.mxu0 %v1017
        %1052 = vmatprep.subr.bf16.mxu0 0
        %1053 = vmatpush1.bf16.msra.mxu0 %v1018
        %1054 = vmatprep.subr.bf16.mxu0 0
        %1055 = vmatpush1.bf16.msra.mxu0 %v1019
        %1056 = vmatprep.subr.bf16.mxu0 0
        %1057 = vmatpush1.bf16.msra.mxu0 %v1020
        %1058 = vmatprep.subr.bf16.mxu0 0
        %1059 = vmatpush1.bf16.msra.mxu0 %v1021
        %1060 = vmatprep.subr.bf16.mxu0 0
        %1061 = vmatpush1.bf16.msra.mxu0 %v1022
        %1062 = vmatprep.subr.bf16.mxu0 0
        %1063 = vmatpush1.bf16.msra.mxu0 %v1023
        %1064 = vmatprep.subr.bf16.mxu0 0
        %1065 = vmatpush1.bf16.msra.mxu0 %v1024
        %1066 = vmatprep.subr.bf16.mxu0 0
        %1067 = vmatpush1.bf16.msra.mxu0 %v1025
        %1068 = vmatprep.subr.bf16.mxu0 0
        %1069 = vmatpush1.bf16.msra.mxu0 %v1026
        %1070 = vmatprep.subr.bf16.mxu0 0
        %1071 = vmatpush1.bf16.msra.mxu0 %v1027
        %1072 = vmatprep.subr.bf16.mxu0 0
        %1073 = vmatpush1.bf16.msra.mxu0 %v1028
        %1074 = vmatprep.subr.bf16.mxu0 0
        %1075 = vmatpush1.bf16.msra.mxu0 %v1029
        %1076 = vmatprep.subr.bf16.mxu0 0
        %1077 = vmatpush1.bf16.msra.mxu0 %v1030
        %1078 = vmatprep.subr.bf16.mxu0 0
        %1079 = vmatpush1.bf16.msra.mxu0 %v1031
        %1080 = vmatprep.mubr.bf16.mxu0 %v949
        %1081 = vmatmul.mubr.bf16.gmra.mrb[0].mxu0 %v948
        %v1082 = vpop.f32.mrb[0].mxu0
        %v1083 = vadd.f32 0.0, %v1082
        %v1084 = vpop.f32.mrb[0].mxu0
        %v1085 = vpop.f32.mrb[0].mxu0
        %v1086 = vpop.f32.mrb[0].mxu0
        %1087 = vdwg.mxu0
        %s1088 = scalar_lea.vmem [#allocation8], 128
        %v1089 = vld [vmem:[%s1088] sm:$0xf]
        %v1090 = vld [vmem:[%s1088 + $0x4] sm:$0xf]
        %v1091 = vld [vmem:[%s1088 + $0x8] sm:$0xf]
        %v1092 = vld [vmem:[%s1088 + $0xc] sm:$0xf]
        %v1093 = vld [vmem:[%s1088 + $0x10] sm:$0xf]
        %v1094 = vld [vmem:[%s1088 + $0x14] sm:$0xf]
        %v1095 = vld [vmem:[%s1088 + $0x18] sm:$0xf]
        %v1096 = vld [vmem:[%s1088 + $0x1c] sm:$0xf]
        %v1097 = vld [vmem:[%s1088 + $0x20] sm:$0xf]
        %v1098 = vld [vmem:[%s1088 + $0x24] sm:$0xf]
        %v1099 = vld [vmem:[%s1088 + $0x28] sm:$0xf]
        %v1100 = vld [vmem:[%s1088 + $0x2c] sm:$0xf]
        %v1101 = vld [vmem:[%s1088 + $0x30] sm:$0xf]
        %v1102 = vld [vmem:[%s1088 + $0x34] sm:$0xf]
        %v1103 = vld [vmem:[%s1088 + $0x38] sm:$0xf]
        %v1104 = vld [vmem:[%s1088 + $0x3c] sm:$0xf]
        %v1105 = vld [vmem:[%s1088 + $0x40] sm:$0xf]
        %v1106 = vld [vmem:[%s1088 + $0x44] sm:$0xf]
        %v1107 = vld [vmem:[%s1088 + $0x48] sm:$0xf]
        %v1108 = vld [vmem:[%s1088 + $0x4c] sm:$0xf]
        %v1109 = vld [vmem:[%s1088 + $0x50] sm:$0xf]
        %v1110 = vld [vmem:[%s1088 + $0x54] sm:$0xf]
        %v1111 = vld [vmem:[%s1088 + $0x58] sm:$0xf]
        %v1112 = vld [vmem:[%s1088 + $0x5c] sm:$0xf]
        %v1113 = vld [vmem:[%s1088 + $0x60] sm:$0xf]
        %v1114 = vld [vmem:[%s1088 + $0x64] sm:$0xf]
        %v1115 = vld [vmem:[%s1088 + $0x68] sm:$0xf]
        %v1116 = vld [vmem:[%s1088 + $0x6c] sm:$0xf]
        %v1117 = vld [vmem:[%s1088 + $0x70] sm:$0xf]
        %v1118 = vld [vmem:[%s1088 + $0x74] sm:$0xf]
        %v1119 = vld [vmem:[%s1088 + $0x78] sm:$0xf]
        %v1120 = vld [vmem:[%s1088 + $0x7c] sm:$0xf]
        %v1153 = vunpack.c.l.b16 %v1089
        %v1154 = vunpack.c.l.b16 %v1090
        %v1155 = vunpack.c.l.b16 %v1091
        %v1156 = vunpack.c.l.b16 %v1092
        %v1157 = vunpack.c.l.b16 %v1093
        %v1158 = vunpack.c.l.b16 %v1094
        %v1159 = vunpack.c.l.b16 %v1095
        %v1160 = vunpack.c.l.b16 %v1096
        %v1161 = vunpack.c.l.b16 %v1097
        %v1162 = vunpack.c.l.b16 %v1098
        %v1163 = vunpack.c.l.b16 %v1099
        %v1164 = vunpack.c.l.b16 %v1100
        %v1165 = vunpack.c.l.b16 %v1101
        %v1166 = vunpack.c.l.b16 %v1102
        %v1167 = vunpack.c.l.b16 %v1103
        %v1168 = vunpack.c.l.b16 %v1104
        %v1169 = vunpack.c.l.b16 %v1105
        %v1170 = vunpack.c.l.b16 %v1106
        %v1171 = vunpack.c.l.b16 %v1107
        %v1172 = vunpack.c.l.b16 %v1108
        %v1173 = vunpack.c.l.b16 %v1109
        %v1174 = vunpack.c.l.b16 %v1110
        %v1175 = vunpack.c.l.b16 %v1111
        %v1176 = vunpack.c.l.b16 %v1112
        %v1177 = vunpack.c.l.b16 %v1113
        %v1178 = vunpack.c.l.b16 %v1114
        %v1179 = vunpack.c.l.b16 %v1115
        %v1180 = vunpack.c.l.b16 %v1116
        %v1181 = vunpack.c.l.b16 %v1117
        %v1182 = vunpack.c.l.b16 %v1118
        %v1183 = vunpack.c.l.b16 %v1119
        %v1184 = vunpack.c.l.b16 %v1120
        %v1185 = vpack.c.b16 %v1154, %v1153
        %v1186 = vpack.c.b16 %v1156, %v1155
        %v1187 = vpack.c.b16 %v1158, %v1157
        %v1188 = vpack.c.b16 %v1160, %v1159
        %v1189 = vpack.c.b16 %v1162, %v1161
        %v1190 = vpack.c.b16 %v1164, %v1163
        %v1191 = vpack.c.b16 %v1166, %v1165
        %v1192 = vpack.c.b16 %v1168, %v1167
        %v1193 = vpack.c.b16 %v1170, %v1169
        %v1194 = vpack.c.b16 %v1172, %v1171
        %v1195 = vpack.c.b16 %v1174, %v1173
        %v1196 = vpack.c.b16 %v1176, %v1175
        %v1197 = vpack.c.b16 %v1178, %v1177
        %v1198 = vpack.c.b16 %v1180, %v1179
        %v1199 = vpack.c.b16 %v1182, %v1181
        %v1200 = vpack.c.b16 %v1184, %v1183
        %1217 = vmatprep.subr.bf16.mxu0 0
        %1218 = vmatpush1.bf16.msra.mxu0 %v1185
        %1219 = vmatprep.subr.bf16.mxu0 0
        %1220 = vmatpush1.bf16.msra.mxu0 %v1186
        %1221 = vmatprep.subr.bf16.mxu0 0
        %1222 = vmatpush1.bf16.msra.mxu0 %v1187
        %1223 = vmatprep.subr.bf16.mxu0 0
        %1224 = vmatpush1.bf16.msra.mxu0 %v1188
        %1225 = vmatprep.subr.bf16.mxu0 0
        %1226 = vmatpush1.bf16.msra.mxu0 %v1189
        %1227 = vmatprep.subr.bf16.mxu0 0
        %1228 = vmatpush1.bf16.msra.mxu0 %v1190
        %1229 = vmatprep.subr.bf16.mxu0 0
        %1230 = vmatpush1.bf16.msra.mxu0 %v1191
        %1231 = vmatprep.subr.bf16.mxu0 0
        %1232 = vmatpush1.bf16.msra.mxu0 %v1192
        %1233 = vmatprep.subr.bf16.mxu0 0
        %1234 = vmatpush1.bf16.msra.mxu0 %v1193
        %1235 = vmatprep.subr.bf16.mxu0 0
        %1236 = vmatpush1.bf16.msra.mxu0 %v1194
        %1237 = vmatprep.subr.bf16.mxu0 0
        %1238 = vmatpush1.bf16.msra.mxu0 %v1195
        %1239 = vmatprep.subr.bf16.mxu0 0
        %1240 = vmatpush1.bf16.msra.mxu0 %v1196
        %1241 = vmatprep.subr.bf16.mxu0 0
        %1242 = vmatpush1.bf16.msra.mxu0 %v1197
        %1243 = vmatprep.subr.bf16.mxu0 0
        %1244 = vmatpush1.bf16.msra.mxu0 %v1198
        %1245 = vmatprep.subr.bf16.mxu0 0
        %1246 = vmatpush1.bf16.msra.mxu0 %v1199
        %1247 = vmatprep.subr.bf16.mxu0 0
        %1248 = vmatpush1.bf16.msra.mxu0 %v1200
        %1249 = vmatprep.mubr.bf16.mxu0 %v949
        %1250 = vmatmul.mubr.bf16.gmra.mrb[0].mxu0 %v948
        %v1251 = vpop.f32.mrb[0].mxu0
        %v1252 = vadd.f32 0.0, %v1251
        %v1253 = vpop.f32.mrb[0].mxu0
        %v1254 = vpop.f32.mrb[0].mxu0
        %v1255 = vpop.f32.mrb[0].mxu0
        %1256 = vdwg.mxu0
        %v1257 = vld [vmem:[%s0] sm:$0xff]
        %v1258 = vld [vmem:[%s0 + $0x8] sm:$0xff]
        %v1259 = vld [vmem:[%s1] sm:$0xff]
        %v1260 = vld [vmem:[%s1 + $0x8] sm:$0xff]
        %1262 = vset.pattern.permute.xlu0 0
        %1263 = vperm.xlu0 %1262, %v1259
        %v1264 = vpop.permute.xlu0 %1263
        %1267 = vset.pattern.permute.xlu0 0
        %1268 = vperm.xlu0 %1267, %v1260
        %v1269 = vpop.permute.xlu0 %1268
        %vm1271 = vcmask 130048
        %v1273 = vsel %vm1271, %v1257, 0
        %v1276 = vsel %vm1271, %v1258, 0
        %1278 = vmatprep.subr.mxu0 0.0
        %1279 = vmatpush1.msra.mxu0 %v1083
        %1280 = vmatprep.subr.mxu0 0.0
        %1281 = vmatpush1.msra.mxu0 %v1252
        %1282 = vmatprep.subr.mxu0 0.0
        %1283 = vmatpush1.msra.mxu0 0.0
        %1284 = vmatprep.subr.mxu0 0.0
        %1285 = vmatpush1.msra.mxu0 0.0
        %1286 = vmatprep.subr.mxu0 0.0
        %1287 = vmatpush1.msra.mxu0 0.0
        %1288 = vmatprep.subr.mxu0 0.0
        %1289 = vmatpush1.msra.mxu0 0.0
        %1290 = vmatprep.subr.mxu0 0.0
        %1291 = vmatpush1.msra.mxu0 0.0
        %1292 = vmatprep.subr.mxu0 0.0
        %1293 = vmatpush1.msra.mxu0 0.0
        %1294 = vmatprep.subr.mxu0 0.0
        %1295 = vmatpush1.msra.mxu0 0.0
        %1296 = vmatprep.subr.mxu0 0.0
        %1297 = vmatpush1.msra.mxu0 0.0
        %1298 = vmatprep.subr.mxu0 0.0
        %1299 = vmatpush1.msra.mxu0 0.0
        %1300 = vmatprep.subr.mxu0 0.0
        %1301 = vmatpush1.msra.mxu0 0.0
        %1302 = vmatprep.subr.mxu0 0.0
        %1303 = vmatpush1.msra.mxu0 0.0
        %1304 = vmatprep.subr.mxu0 0.0
        %1305 = vmatpush1.msra.mxu0 0.0
        %1306 = vmatprep.subr.mxu0 0.0
        %1307 = vmatpush1.msra.mxu0 0.0
        %1308 = vmatprep.subr.mxu0 0.0
        %1309 = vmatpush1.msra.mxu0 0.0
        %1310 = vmatprep.subr.mxu0 0.0
        %1311 = vmatpush1.msra.mxu0 0.0
        %1312 = vmatprep.subr.mxu0 0.0
        %1313 = vmatpush1.msra.mxu0 0.0
        %1314 = vmatprep.subr.mxu0 0.0
        %1315 = vmatpush1.msra.mxu0 0.0
        %1316 = vmatprep.subr.mxu0 0.0
        %1317 = vmatpush1.msra.mxu0 0.0
        %1318 = vmatprep.subr.mxu0 0.0
        %1319 = vmatpush1.msra.mxu0 0.0
        %1320 = vmatprep.subr.mxu0 0.0
        %1321 = vmatpush1.msra.mxu0 0.0
        %1322 = vmatprep.subr.mxu0 0.0
        %1323 = vmatpush1.msra.mxu0 0.0
        %1324 = vmatprep.subr.mxu0 0.0
        %1325 = vmatpush1.msra.mxu0 0.0
        %1326 = vmatprep.subr.mxu0 0.0
        %1327 = vmatpush1.msra.mxu0 0.0
        %1328 = vmatprep.subr.mxu0 0.0
        %1329 = vmatpush1.msra.mxu0 0.0
        %1330 = vmatprep.subr.mxu0 0.0
        %1331 = vmatpush1.msra.mxu0 0.0
        %1332 = vmatprep.subr.mxu0 0.0
        %1333 = vmatpush1.msra.mxu0 0.0
        %1334 = vmatprep.subr.mxu0 0.0
        %1335 = vmatpush1.msra.mxu0 0.0
        %1336 = vmatprep.subr.mxu0 0.0
        %1337 = vmatpush1.msra.mxu0 0.0
        %1338 = vmatprep.subr.mxu0 0.0
        %1339 = vmatpush1.msra.mxu0 0.0
        %1340 = vmatprep.subr.mxu0 0.0
        %1341 = vmatpush1.msra.mxu0 0.0
        %1342 = vmatprep.mubr.f32.mxu0 0.0
        %1343 = vmatmul.mubr.f32.gmra.mrb[0].mxu0 %v1273
        %v1344 = vpop.f32.mrb[0].mxu0
        %v1345 = vadd.f32 %v1264, %v1344
        %v1346 = vpop.f32.mrb[0].mxu0
        %1347 = vmatprep.mubr.f32.mxu0 0.0
        %1348 = vmatmul.mubr.f32.gmra.mrb[0].mxu0 %v1276
        %v1349 = vpop.f32.mrb[0].mxu0
        %v1350 = vadd.f32 %v1269, %v1349
        %v1351 = vpop.f32.mrb[0].mxu0
        %1352 = vdwg.mxu0
        %v1353 = vmax.f32 %v1345, 0.0
        %1354 = vst [vmem:[%s280] sm:$0xff] %v1353
        %1355 = vst [vmem:[%s280 + $0x8] sm:$0xff] %v1350
        %s1356 = sand.u32 %s147, 1
        %s1357 = sand.u32 %s147, 1
        %s1358 = smul.addr %s1357, 16
        %s1359 = scalar_lea.vmem [#allocation6], %s1358
        // Predicated region
        $region45: #{gnn_atomic_forward.4} parent=35 // pred_check
          %p1360 = pneg %p157
        $region46: #{gnn_atomic_forward.4} parent=35 // pred_check_branch
          %1362 = sbr.rel (%p1360) target = $region48
        $region47: #{gnn_atomic_forward.4} parent=35 // pred_region
          %s1363 = smul.addr %s25, 4
          %s1364 = sadd.s32 %s26, %s1363
          %s1365 = smul.addr %s1364, 8
          %s1366 = scalar_lea.vmem %s4, %s1365
          // Predicated region
          $region49: #{gnn_atomic_forward.4} parent=47 // pred_check
            _
          $region50: #{gnn_atomic_forward.4} parent=47 // pred_check_branch
            %1368 = sbr.rel (0) target = $region52
          $region51: #{gnn_atomic_forward.4} parent=47 // pred_region
            // Predicated region
            $region53: #{gnn_atomic_forward.4} parent=51 // pred_check
              _
            $region54: #{gnn_atomic_forward.4} parent=51 // pred_check_branch
              %1370 = sbr.rel (0) target = $region56
            $region55: #{gnn_atomic_forward.4} parent=51 // pred_region
              // Predicated region
              $region68: #{gnn_atomic_forward.4} parent=55 // pred_check
                _
              $region69: #{gnn_atomic_forward.4} parent=55 // pred_check_branch
                %1387 = sbr.rel (0) target = $region71
              $region70: #{gnn_atomic_forward.4} parent=55 // pred_region
                loop: start=0, step=1, limit=1
                $region72: #{gnn_atomic_forward.4} parent=70 // loop_pre_header
                  _
                $region73: #{gnn_atomic_forward.4} parent=70 // loop_header
                  %s1389 = sphi 0, %s1393
                  %p1390 = scmp.ge.s32.totalorder %s1389, 1
                  %s1394 = sphi %s1359, %s1359
                  %s1395 = sphi %s1366, %s1366
                $region74: #{gnn_atomic_forward.4} parent=70 // loop_header_branch
                  %1392 = sbr.rel (%p1390) target = $region78
                $region75: #{gnn_atomic_forward.4} parent=70 // loop_body
                  %v1396 = vld [vmem:[%s1394] sm:$0xff]
                  %1397 = vst [vmem:[%s1395] sm:$0xff] %v1396
                  %v1398 = vld [vmem:[%s1394 + $0x8] sm:$0xff]
                  %1399 = vst [vmem:[%s1395 + $0x10] sm:$0xff] %v1398
                $region76: #{gnn_atomic_forward.4} parent=70 // loop_footer
                  %s1393 = sadd.s32 1, %s1389
                $region77: #{gnn_atomic_forward.4} parent=70 // loop_footer_branch
                  %1388 = sbr.rel target = $region73
                $region78: #{gnn_atomic_forward.4} parent=70 // loop_exit
                  _
              $region71: #{gnn_atomic_forward.4} parent=55 // pred_fallthru
                _
              // Predicated region
              $region79: #{gnn_atomic_forward.4} parent=55 // pred_check
                _
              $region80: #{gnn_atomic_forward.4} parent=55 // pred_check_branch
                %1401 = sbr.rel target = $region82
              $region81: #{gnn_atomic_forward.4} parent=55 // pred_region
                _
              $region82: #{gnn_atomic_forward.4} parent=55 // pred_fallthru
                _
            $region56: #{gnn_atomic_forward.4} parent=51 // pred_fallthru
              _
            // Predicated region
            $region57: #{gnn_atomic_forward.4} parent=51 // pred_check
              _
            $region58: #{gnn_atomic_forward.4} parent=51 // pred_check_branch
              %1372 = sbr.rel target = $region60
            $region59: #{gnn_atomic_forward.4} parent=51 // pred_region
              loop: start=0, step=1, limit=1
              $region61: #{gnn_atomic_forward.4} parent=59 // loop_pre_header
                _
              $region62: #{gnn_atomic_forward.4} parent=59 // loop_header
                %s1375 = sphi 0, %s1379
                %p1376 = scmp.ge.s32.totalorder %s1375, 1
                %s1380 = sphi %s1359, %s1359
                %s1381 = sphi %s1366, %s1366
              $region63: #{gnn_atomic_forward.4} parent=59 // loop_header_branch
                %1378 = sbr.rel (%p1376) target = $region67
              $region64: #{gnn_atomic_forward.4} parent=59 // loop_body
                %v1382 = vld [vmem:[%s1380] sm:$0xff]
                %1383 = vst [vmem:[%s1381] sm:$0xff] %v1382
                %v1384 = vld [vmem:[%s1380 + $0x8] sm:$0xff]
                %1385 = vst [vmem:[%s1381 + $0x10] sm:$0xff] %v1384
              $region65: #{gnn_atomic_forward.4} parent=59 // loop_footer
                %s1379 = sadd.s32 1, %s1375
              $region66: #{gnn_atomic_forward.4} parent=59 // loop_footer_branch
                %1374 = sbr.rel target = $region62
              $region67: #{gnn_atomic_forward.4} parent=59 // loop_exit
                _
            $region60: #{gnn_atomic_forward.4} parent=51 // pred_fallthru
              _
          $region52: #{gnn_atomic_forward.4} parent=47 // pred_fallthru
            _
          %1402 = vnop
        $region48: #{gnn_atomic_forward.4} parent=35 // pred_fallthru
          _
      $region36: #{gnn_atomic_forward.4} parent=5 // pred_fallthru
        _
      %p1403 = scmp.le.s32.totalorder 2, %s16
      // Predicated region
      $region83: #{gnn_atomic_forward.4} parent=5 // pred_check
        %p1404 = pneg %p1403
      $region84: #{gnn_atomic_forward.4} parent=5 // pred_check_branch
        %1406 = sbr.rel (%p1404) target = $region86
      $region85: #{gnn_atomic_forward.4} parent=5 // pred_region
        %s1407 = ssub.s32 %s16, 2
        // Predicated region
        $region87: #{gnn_atomic_forward.4} parent=85 // pred_check
          %p1408 = pneg %p163
        $region88: #{gnn_atomic_forward.4} parent=85 // pred_check_branch
          %1410 = sbr.rel (%p1408) target = $region90
        $region89: #{gnn_atomic_forward.4} parent=85 // pred_region
          %s1411 = sand.u32 %s148, 1
          %s1412 = sand.u32 %s148, 1
          %s1413 = smul.addr %s1412, 16
          %s1414 = scalar_lea.vmem [#allocation6], %s1413
        $region90: #{gnn_atomic_forward.4} parent=85 // pred_fallthru
          _
      $region86: #{gnn_atomic_forward.4} parent=5 // pred_fallthru
        _
    $region6: #{gnn_atomic_forward.4} parent=1 // loop_footer
      %s20 = sadd.s32 1, %s16
    $region7: #{gnn_atomic_forward.4} parent=1 // loop_footer_branch
      %15 = sbr.rel target = $region3
    $region8: #{gnn_atomic_forward.4} parent=1 // loop_exit
      _
    %1415 = vsyncpa [#allocation3], 1
    %s1416 = scalar_lea.sflag [#allocation3], 1
    %1417 = vsyncpa %s1416, 1
    %1418 = vsyncpa [#allocation5], 1
    %s1419 = scalar_lea.sflag [#allocation5], 1
    %1420 = vsyncpa %s1419, 1

</llo_original>
